<compile_context>
chip_gen: v5e
topology: v5e:2x2
jax: 0.10.0
libtpu: 0.0.40
codegen_flags: <defaults>
</compile_context>

<pallas_src>
import functools
import math

import jax
import jax.numpy as jnp
from jax.experimental import pallas as pl
from jax.experimental.pallas import tpu as pltpu


def _round_up(x, m):
    return ((x + m - 1) // m) * m


def _mha_kernel(q_ref, k_ref, v_ref,
                wq_ref, bq_ref, wk_ref, bk_ref, wv_ref, bv_ref,
                wp_ref, bp_ref,
                o_ref, *, n_heads, mxu_dtype, approx_recip):
    """Fused MHA for a block of B_blk batch elements (channels-last layout).

    q_ref: (B, t1, q_dim); k_ref/v_ref: (B, t2, kv_dim).
    Weights are stored (in, out) with the per-head output dim zero-padded to
    d_pad (a multiple of 128) and the softmax scale folded into wq/bq by the
    wrapper, so a 1x1 Conv1d is just `x @ W + b`.
    """
    B, t1, _ = q_ref.shape
    _, t2, _ = k_ref.shape
    e_pad = wq_ref.shape[1]
    d_pad = e_pad // n_heads
    out_pad = wp_ref.shape[1]

    def proj(x_ref, t, w_ref, b_ref):
        # 1x1 Conv1d == one (B*t, c) @ (c, e_pad) MXU matmul, f32 accumulation.
        # The merge reshape is free here because t1/t2 blocks are full extents
        # (keep them 8-sublane multiples if this kernel is ever tiled over t).
        x = x_ref[...].reshape(B * t, x_ref.shape[-1])
        return jnp.dot(x, w_ref[...], preferred_element_type=jnp.float32) + b_ref[...]

    q2 = proj(q_ref, t1, wq_ref, bq_ref)          # (B*t1, e_pad)  (scale folded in)
    k2 = proj(k_ref, t2, wk_ref, bk_ref)          # (B*t2, e_pad)
    v2 = proj(v_ref, t2, wv_ref, bv_ref)          # (B*t2, e_pad)

    def split_heads(x2, t):
        # (B*t, H*d_pad) -> (H*B, t, d_pad).  Every slice starts/ends on a
        # 128-lane tile boundary (d_pad % 128 == 0), so these are plain tile
        # copies, not masked sub-lane relayouts; the axis-0 concat only places
        # tiles.  (A leading<->sublane transpose is avoided on purpose.)
        x3 = x2.reshape(B, t, e_pad)
        return jnp.concatenate(
            [x3[:, :, h * d_pad:(h + 1) * d_pad] for h in range(n_heads)], axis=0)

    qh = split_heads(q2.astype(mxu_dtype), t1)    # (H*B, t1, d_pad)
    kh = split_heads(k2.astype(mxu_dtype), t2)    # (H*B, t2, d_pad)
    vh = split_heads(v2, t2)                      # stays f32: P @ V runs in f32

    # Scores: single batched contraction over d_pad (>=128 lanes, MXU-dense),
    # no explicit transposes anywhere.
    s = jnp.einsum('bqd,bkd->bqk', qh, kh,
                   preferred_element_type=jnp.float32)      # (H*B, t1, t2) f32
    m = jnp.max(s, axis=-1, keepdims=True)
    p = jnp.exp(s - m)                                      # unnormalized probs (f32)
    denom = jnp.sum(p, axis=-1, keepdims=True)              # (H*B, t1, 1)

    # Context: P (and V) kept in f32 (review accuracy note); output lanes dense.
    ctx = jnp.einsum('bqk,bkd->bqd', p, vh,
                     preferred_element_type=jnp.float32)    # (H*B, t1, d_pad)
    # Normalize the small (t1, d_pad) context instead of the (t1, t2) matrix.
    ctx = ctx * pl.reciprocal(denom, approx=approx_recip)

    # Heads back onto the channel axis: tile-aligned lane concat, then one
    # (B*t1, e_pad) @ (e_pad, out_pad) output-projection matmul (out_pad is a
    # 128-multiple -> unmasked, lane-dense output store).
    out3 = jnp.concatenate([ctx[h * B:(h + 1) * B] for h in range(n_heads)], axis=-1)
    y = jnp.dot(out3.reshape(B * t1, e_pad).astype(mxu_dtype), wp_ref[...],
                preferred_element_type=jnp.float32) + bp_ref[...]   # (B*t1, out_pad)
    o_ref[...] = y.reshape(B, t1, out_pad).astype(o_ref.dtype)


def _vmem_limit_bytes():
    """VMEM limit from physical capacity: ~48 MiB on v7x, ~96 MiB on v5e/v6e."""
    try:
        phys = getattr(pltpu.get_tpu_info(), "vmem_capacity_bytes", None)
    except Exception:
        phys = None
    if not phys:
        return 48 * 1024 * 1024
    return int(max(32 * 1024 * 1024, min(phys * 3 // 4, 100 * 1024 * 1024)))


def _pick_batch_block(bs, t1, t2, q_dim, kv_dim, e_pad, d_pad, out_pad, n_heads,
                      act_bytes, out_bytes, vmem_limit):
    """Largest divisor of bs whose working set fits the VMEM budget.

    Counts double-buffered input/output blocks, (double-buffered) weights and
    the resident f32 intermediates.  Capped at bs // 2 so the batch grid has
    length >= 2 (both v7x TensorCores get work); soft cap of ~1024 projection
    rows per step (per-step overhead is well amortized by then).
    """
    budget = int(vmem_limit * 0.75)          # headroom for compiler scratch
    f32 = 4
    w_bytes = 2 * (act_bytes * ((q_dim + 2 * kv_dim) * e_pad + e_pad * out_pad)
                   + f32 * (3 * e_pad + out_pad))

    def step_bytes(b):
        io = (2 * act_bytes * b * (t1 * q_dim + 2 * t2 * kv_dim)
              + 2 * out_bytes * b * t1 * out_pad)
        inter = f32 * b * (2 * (t1 + 2 * t2) * e_pad        # q2/k2/v2 + head split
                           + 2 * n_heads * t1 * t2          # scores + probs
                           + 2 * n_heads * t1 * d_pad       # ctx + merged heads
                           + t1 * out_pad)                  # projected output
        return io + inter

    cap = max(1, bs // 2)
    best = 1
    for cand in range(1, cap + 1):
        if bs % cand:
            continue
        if cand * max(t1, t2) > 1024:
            break
        if w_bytes + step_bytes(cand) <= budget:
            best = cand
    return best


def multi_head_attention_ntc(q_ntc, k_ntc, v_ntc, params, *, n_heads,
                             mxu_dtype=jnp.float32, batch_block=None,
                             approx_recip=True, out_dtype=None):
    """Channels-last API (no boundary transposes).

    q_ntc: (bs, t1, q_dim); k_ntc/v_ntc: (bs, t2, kv_dim) or None (self-attn).
    Returns (bs, t1, out_dim).
    """
    if k_ntc is None:
        k_ntc = q_ntc
    if v_ntc is None:
        v_ntc = q_ntc

    bs, t1, q_dim = q_ntc.shape
    _, t2, kv_dim = k_ntc.shape
    embd_dim = params["wq"].shape[1]
    out_dim = params["wp"].shape[1]
    assert embd_dim % n_heads == 0, (embd_dim, n_heads)
    d = embd_dim // n_heads
    scale = 1.0 / math.sqrt(d)
    if out_dtype is None:
        out_dtype = q_ntc.dtype

    # Lane-dense padded dims (all padding is with zeros and mathematically inert).
    d_pad = _round_up(d, 128)
    e_pad = n_heads * d_pad
    out_pad = _round_up(out_dim, 128)

    # --- fold the softmax scale into Wq/bq and zero-pad per-head dims. -------
    def pad_heads(x, rows):                       # (rows, H*d) -> (rows, H*d_pad)
        x = x.reshape(rows, n_heads, d)
        x = jnp.pad(x, ((0, 0), (0, 0), (0, d_pad - d)))
        return x.reshape(rows, e_pad)

    wq = pad_heads(params["wq"] * scale, q_dim)
    bq = pad_heads(params["bq"] * scale, 1)
    wk = pad_heads(params["wk"], kv_dim)
    bk = pad_heads(params["bk"], 1)
    wv = pad_heads(params["wv"], kv_dim)
    bv = pad_heads(params["bv"], 1)
    # Output projection: zero rows where ctx is padded, zero cols up to out_pad.
    wp = params["wp"].reshape(n_heads, d, out_dim)
    wp = jnp.pad(wp, ((0, 0), (0, d_pad - d), (0, out_pad - out_dim)))
    wp = wp.reshape(e_pad, out_pad)
    bp = jnp.pad(params["bp"], ((0, 0), (0, out_pad - out_dim)))

    # --- bf16 MXU path: cast the big operands in the WRAPPER (halves DMA bytes
    # and the double-buffered VMEM footprint). Biases stay f32. ---------------
    q_in = q_ntc.astype(mxu_dtype)
    k_in = k_ntc.astype(mxu_dtype)
    v_in = v_ntc.astype(mxu_dtype)
    wq = wq.astype(mxu_dtype); wk = wk.astype(mxu_dtype)
    wv = wv.astype(mxu_dtype); wp = wp.astype(mxu_dtype)
    bq = bq.astype(jnp.float32); bk = bk.astype(jnp.float32)
    bv = bv.astype(jnp.float32); bp = bp.astype(jnp.float32)

    vmem_limit = _vmem_limit_bytes()
    act_bytes = jnp.dtype(mxu_dtype).itemsize
    out_bytes = jnp.dtype(out_dtype).itemsize
    if batch_block is not None:
        b_blk = batch_block
    else:
        b_blk = _pick_batch_block(bs, t1, t2, q_dim, kv_dim, e_pad, d_pad,
                                  out_pad, n_heads, act_bytes, out_bytes,
                                  vmem_limit)
    assert bs % b_blk == 0, (bs, b_blk)

    # TODO(synk): add flash-style t1/t2 tiling (online-softmax accumulator in
    # VMEM scratch) before using this at long sequence lengths on v7x; here the
    # full (b_blk*H, t1, t2) f32 score block stays resident.

    kernel = functools.partial(_mha_kernel, n_heads=n_heads,
                               mxu_dtype=mxu_dtype, approx_recip=approx_recip)

    out_padded = pl.pallas_call(
        kernel,
        out_shape=jax.ShapeDtypeStruct((bs, t1, out_pad), out_dtype),
        grid_spec=pltpu.PrefetchScalarGridSpec(
            num_scalar_prefetch=0,
            grid=(bs // b_blk,),
            in_specs=[
                pl.BlockSpec((b_blk, t1, q_dim), lambda b: (b, 0, 0)),
                pl.BlockSpec((b_blk, t2, kv_dim), lambda b: (b, 0, 0)),
                pl.BlockSpec((b_blk, t2, kv_dim), lambda b: (b, 0, 0)),
                pl.BlockSpec((q_dim, e_pad), lambda b: (0, 0)),
                pl.BlockSpec((1, e_pad), lambda b: (0, 0)),
                pl.BlockSpec((kv_dim, e_pad), lambda b: (0, 0)),
                pl.BlockSpec((1, e_pad), lambda b: (0, 0)),
                pl.BlockSpec((kv_dim, e_pad), lambda b: (0, 0)),
                pl.BlockSpec((1, e_pad), lambda b: (0, 0)),
                pl.BlockSpec((e_pad, out_pad), lambda b: (0, 0)),
                pl.BlockSpec((1, out_pad), lambda b: (0, 0)),
            ],
            out_specs=pl.BlockSpec((b_blk, t1, out_pad), lambda b: (b, 0, 0)),
        ),
        compiler_params=pltpu.CompilerParams(
            dimension_semantics=("parallel",),
            vmem_limit_bytes=int(vmem_limit),
        ),
    )(q_in, k_in, v_in, wq, bq, wk, bk, wv, bv, wp, bp)

    if out_pad != out_dim:
        out_padded = out_padded[:, :, :out_dim]
    return out_padded


def multi_head_attention(q_nct, k_nct=None, v_nct=None, params=None, *, n_heads,
                         mxu_dtype=jnp.float32, batch_block=None,
                         approx_recip=True):
    """PyTorch-parity shim: q (bs, q_dim, t1); k/v (bs, kv_dim, t2) -> (bs, out_dim, t1).

    Prefer `multi_head_attention_ntc` (channels-last) to avoid the two HBM
    transposes this compatibility wrapper adds around the kernel.
    """
    if k_nct is None:
        k_nct = q_nct
    if v_nct is None:
        v_nct = q_nct
    q_ntc = jnp.transpose(q_nct, (0, 2, 1))
    k_ntc = jnp.transpose(k_nct, (0, 2, 1))
    v_ntc = jnp.transpose(v_nct, (0, 2, 1))
    out_ntc = multi_head_attention_ntc(q_ntc, k_ntc, v_ntc, params,
                                       n_heads=n_heads, mxu_dtype=mxu_dtype,
                                       batch_block=batch_block,
                                       approx_recip=approx_recip)
    return jnp.transpose(out_ntc, (0, 2, 1))


def init_params(key, embd_dim, q_dim, kv_dim, out_dim):
    """Synthetic parameters for the four 1x1 Conv1d layers.

    PyTorch Conv1d(in, out, 1) has weight (out, in, 1) and bias (out,).  We
    store weights pre-transposed as (in, out) so the kernel computes y = x@W+b.
    """
    keys = jax.random.split(key, 8)

    def conv_init(kw, kb, in_c, out_c):
        bound = 1.0 / math.sqrt(in_c)
        w = jax.random.uniform(kw, (in_c, out_c), jnp.float32, -bound, bound)
        b = jax.random.uniform(kb, (1, out_c), jnp.float32, -bound, bound)
        return w, b

    wq, bq = conv_init(keys[0], keys[1], q_dim, embd_dim)
    wk, bk = conv_init(keys[2], keys[3], kv_dim, embd_dim)
    wv, bv = conv_init(keys[4], keys[5], kv_dim, embd_dim)
    wp, bp = conv_init(keys[6], keys[7], embd_dim, out_dim)
    return dict(wq=wq, bq=bq, wk=wk, bk=bk, wv=wv, bv=bv, wp=wp, bp=bp)


def reference_mha(q_nct, k_nct, v_nct, params, *, n_heads):
    """Pure-JAX f32 reference mirroring the PyTorch forward, for verification."""
    if k_nct is None:
        k_nct = q_nct
    if v_nct is None:
        v_nct = q_nct
    bs = q_nct.shape[0]
    embd_dim = params["wq"].shape[1]
    d = embd_dim // n_heads
    scale = 1.0 / math.sqrt(d)

    def proj(x_nct, w, b):  # 1x1 conv: (bs, c_in, t) -> (bs, c_out, t)
        return jnp.einsum("bct,ce->bet", x_nct, w) + b[0][None, :, None]

    q = proj(q_nct, params["wq"], params["bq"])
    k = proj(k_nct, params["wk"], params["bk"])
    v = proj(v_nct, params["wv"], params["bv"])

    t1 = q.shape[-1]
    t2 = k.shape[-1]
    q = q.reshape(bs, n_heads, d, t1).transpose(0, 1, 3, 2)    # (bs, h, t1, d)
    k = k.reshape(bs, n_heads, d, t2)                          # (bs, h, d, t2)
    v = v.reshape(bs, n_heads, d, t2).transpose(0, 1, 3, 2)    # (bs, h, t2, d)
    attn = jnp.einsum("bhqd,bhdk->bhqk", q * scale, k)
    attn = jax.nn.softmax(attn, axis=-1)
    o = jnp.einsum("bhqk,bhkd->bhqd", attn, v)                 # (bs, h, t1, d)
    o = o.transpose(0, 1, 3, 2).reshape(bs, embd_dim, t1)
    return jnp.einsum("bct,ce->bet", o, params["wp"]) + params["bp"][0][None, :, None]


if __name__ == "__main__":
    # Small shapes: embd_dim=32, n_heads=4 (head dim 8), cross-attention t1=16, t2=8.
    bs, embd_dim, n_heads = 2, 32, 4
    q_dim = kv_dim = out_dim = embd_dim
    t1, t2 = 16, 8

    key = jax.random.PRNGKey(0)
    k_params, k_q, k_k, k_v = jax.random.split(key, 4)
    params = init_params(k_params, embd_dim, q_dim, kv_dim, out_dim)

    q_in = jax.random.normal(k_q, (bs, q_dim, t1), jnp.float32)   # (bs, c, t1), PyTorch NCT
    k_in = jax.random.normal(k_k, (bs, kv_dim, t2), jnp.float32)  # (bs, c, t2)
    v_in = jax.random.normal(k_v, (bs, kv_dim, t2), jnp.float32)  # (bs, c, t2)

    ref = reference_mha(q_in, k_in, v_in, params, n_heads=n_heads)

    # f32 MXU path via the NCT compatibility wrapper (approx softmax reciprocal).
    out = multi_head_attention(q_in, k_in, v_in, params, n_heads=n_heads)
    out = jax.block_until_ready(out)
    assert out.shape == (bs, out_dim, t1), out.shape
    assert jnp.allclose(out, ref, atol=5e-3, rtol=5e-3), \
        float(jnp.max(jnp.abs(out - ref)))

    # Exact-reciprocal parity path.
    out_exact = multi_head_attention(q_in, k_in, v_in, params, n_heads=n_heads,
                                     approx_recip=False)
    out_exact = jax.block_until_ready(out_exact)
    assert jnp.allclose(out_exact, ref, atol=2e-3, rtol=2e-3), \
        float(jnp.max(jnp.abs(out_exact - ref)))

    # Channels-last API: no boundary transposes around the kernel.
    out_ntc = multi_head_attention_ntc(
        jnp.transpose(q_in, (0, 2, 1)),
        jnp.transpose(k_in, (0, 2, 1)),
        jnp.transpose(v_in, (0, 2, 1)),
        params, n_heads=n_heads)
    out_ntc = jax.block_until_ready(out_ntc)
    assert jnp.allclose(jnp.transpose(out_ntc, (0, 2, 1)), ref, atol=5e-3, rtol=5e-3), \
        float(jnp.max(jnp.abs(jnp.transpose(out_ntc, (0, 2, 1)) - ref)))

    # bf16 MXU operands (v6e / v7x throughput path): cast happens in the
    # wrapper, softmax and P@V stay f32, accumulation is f32.
    out_bf16 = multi_head_attention(q_in, k_in, v_in, params, n_heads=n_heads,
                                    mxu_dtype=jnp.bfloat16)
    out_bf16 = jax.block_until_ready(out_bf16)
    assert jnp.allclose(out_bf16, ref, atol=1e-1, rtol=1e-1), \
        float(jnp.max(jnp.abs(out_bf16 - ref)))

    print("KERNEL_OK")
</pallas_src>

<mosaic_0001>
module attributes {stable_mosaic.version = 11 : i64} {
  func.func @_mha_kernel(%arg0: i32, %arg1: memref<1x16x32xf32, #tpu.memory_space<vmem>>, %arg2: memref<1x8x32xf32, #tpu.memory_space<vmem>>, %arg3: memref<1x8x32xf32, #tpu.memory_space<vmem>>, %arg4: memref<32x512xf32, #tpu.memory_space<vmem>>, %arg5: memref<1x512xf32, #tpu.memory_space<vmem>>, %arg6: memref<32x512xf32, #tpu.memory_space<vmem>>, %arg7: memref<1x512xf32, #tpu.memory_space<vmem>>, %arg8: memref<32x512xf32, #tpu.memory_space<vmem>>, %arg9: memref<1x512xf32, #tpu.memory_space<vmem>>, %arg10: memref<512x128xf32, #tpu.memory_space<vmem>>, %arg11: memref<1x128xf32, #tpu.memory_space<vmem>>, %arg12: memref<1x16x128xf32, #tpu.memory_space<vmem>>) attributes {dimension_semantics = [#tpu.dimension_semantics<parallel>], iteration_bounds = array<i64: 2>, scalar_prefetch = 0 : i64, scratch_operands = 0 : i64, tpu.core_type = #tpu.core_type<tc>, window_params = [{transform_indices = @transform_0, window_bounds = array<i64: 1, 16, 32>}, {transform_indices = @transform_1, window_bounds = array<i64: 1, 8, 32>}, {transform_indices = @transform_2, window_bounds = array<i64: 1, 8, 32>}, {pipeline_mode = #tpu.pipeline_mode<synchronous>, transform_indices = @transform_3, window_bounds = array<i64: 32, 512>}, {pipeline_mode = #tpu.pipeline_mode<synchronous>, transform_indices = @transform_4, window_bounds = array<i64: 1, 512>}, {pipeline_mode = #tpu.pipeline_mode<synchronous>, transform_indices = @transform_5, window_bounds = array<i64: 32, 512>}, {pipeline_mode = #tpu.pipeline_mode<synchronous>, transform_indices = @transform_6, window_bounds = array<i64: 1, 512>}, {pipeline_mode = #tpu.pipeline_mode<synchronous>, transform_indices = @transform_7, window_bounds = array<i64: 32, 512>}, {pipeline_mode = #tpu.pipeline_mode<synchronous>, transform_indices = @transform_8, window_bounds = array<i64: 1, 512>}, {pipeline_mode = #tpu.pipeline_mode<synchronous>, transform_indices = @transform_9, window_bounds = array<i64: 512, 128>}, {pipeline_mode = #tpu.pipeline_mode<synchronous>, transform_indices = @transform_10, window_bounds = array<i64: 1, 128>}, {transform_indices = @transform_11, window_bounds = array<i64: 1, 16, 128>}]} {
    %c0 = arith.constant 0 : index
    %c0_0 = arith.constant 0 : index
    %c0_1 = arith.constant 0 : index
    %0 = vector.load %arg1[%c0, %c0_0, %c0_1] : memref<1x16x32xf32, #tpu.memory_space<vmem>>, vector<1x16x32xf32>
    %1 = vector.shape_cast %0 : vector<1x16x32xf32> to vector<16x32xf32>
    %c0_2 = arith.constant 0 : index
    %c0_3 = arith.constant 0 : index
    %2 = vector.load %arg4[%c0_2, %c0_3] : memref<32x512xf32, #tpu.memory_space<vmem>>, vector<32x512xf32>
    %cst = arith.constant dense<0.000000e+00> : vector<16x512xf32>
    %3 = tpu.matmul %1, %2, %cst {dimension_numbers = #tpu.dot_dimension_numbers<[1], [0], [0], [1], [0, 0, 1, 1], [], []>} : vector<16x32xf32>, vector<32x512xf32>, vector<16x512xf32> -> vector<16x512xf32>
    %c0_4 = arith.constant 0 : index
    %c0_5 = arith.constant 0 : index
    %4 = vector.load %arg5[%c0_4, %c0_5] : memref<1x512xf32, #tpu.memory_space<vmem>>, vector<1x512xf32>
    %5 = vector.broadcast %4 : vector<1x512xf32> to vector<16x512xf32>
    %6 = arith.addf %3, %5 : vector<16x512xf32>
    %c0_6 = arith.constant 0 : index
    %c0_7 = arith.constant 0 : index
    %c0_8 = arith.constant 0 : index
    %7 = vector.load %arg2[%c0_6, %c0_7, %c0_8] : memref<1x8x32xf32, #tpu.memory_space<vmem>>, vector<1x8x32xf32>
    %8 = vector.shape_cast %7 : vector<1x8x32xf32> to vector<8x32xf32>
    %c0_9 = arith.constant 0 : index
    %c0_10 = arith.constant 0 : index
    %9 = vector.load %arg6[%c0_9, %c0_10] : memref<32x512xf32, #tpu.memory_space<vmem>>, vector<32x512xf32>
    %cst_11 = arith.constant dense<0.000000e+00> : vector<8x512xf32>
    %10 = tpu.matmul %8, %9, %cst_11 {dimension_numbers = #tpu.dot_dimension_numbers<[1], [0], [0], [1], [0, 0, 1, 1], [], []>} : vector<8x32xf32>, vector<32x512xf32>, vector<8x512xf32> -> vector<8x512xf32>
    %c0_12 = arith.constant 0 : index
    %c0_13 = arith.constant 0 : index
    %11 = vector.load %arg7[%c0_12, %c0_13] : memref<1x512xf32, #tpu.memory_space<vmem>>, vector<1x512xf32>
    %12 = vector.broadcast %11 : vector<1x512xf32> to vector<8x512xf32>
    %13 = arith.addf %10, %12 : vector<8x512xf32>
    %c0_14 = arith.constant 0 : index
    %c0_15 = arith.constant 0 : index
    %c0_16 = arith.constant 0 : index
    %14 = vector.load %arg3[%c0_14, %c0_15, %c0_16] : memref<1x8x32xf32, #tpu.memory_space<vmem>>, vector<1x8x32xf32>
    %15 = vector.shape_cast %14 : vector<1x8x32xf32> to vector<8x32xf32>
    %c0_17 = arith.constant 0 : index
    %c0_18 = arith.constant 0 : index
    %16 = vector.load %arg8[%c0_17, %c0_18] : memref<32x512xf32, #tpu.memory_space<vmem>>, vector<32x512xf32>
    %cst_19 = arith.constant dense<0.000000e+00> : vector<8x512xf32>
    %17 = tpu.matmul %15, %16, %cst_19 {dimension_numbers = #tpu.dot_dimension_numbers<[1], [0], [0], [1], [0, 0, 1, 1], [], []>} : vector<8x32xf32>, vector<32x512xf32>, vector<8x512xf32> -> vector<8x512xf32>
    %c0_20 = arith.constant 0 : index
    %c0_21 = arith.constant 0 : index
    %18 = vector.load %arg9[%c0_20, %c0_21] : memref<1x512xf32, #tpu.memory_space<vmem>>, vector<1x512xf32>
    %19 = vector.broadcast %18 : vector<1x512xf32> to vector<8x512xf32>
    %20 = arith.addf %17, %19 : vector<8x512xf32>
    %21 = vector.shape_cast %6 : vector<16x512xf32> to vector<1x16x512xf32>
    %22 = vector.extract_strided_slice %21 {offsets = [0, 0, 0], sizes = [1, 16, 128], strides = [1, 1, 1]} : vector<1x16x512xf32> to vector<1x16x128xf32>
    %23 = vector.extract_strided_slice %21 {offsets = [0, 0, 128], sizes = [1, 16, 128], strides = [1, 1, 1]} : vector<1x16x512xf32> to vector<1x16x128xf32>
    %24 = vector.extract_strided_slice %21 {offsets = [0, 0, 256], sizes = [1, 16, 128], strides = [1, 1, 1]} : vector<1x16x512xf32> to vector<1x16x128xf32>
    %25 = vector.extract_strided_slice %21 {offsets = [0, 0, 384], sizes = [1, 16, 128], strides = [1, 1, 1]} : vector<1x16x512xf32> to vector<1x16x128xf32>
    %26 = tpu.concatenate %22, %23, %24, %25 in 0 : vector<1x16x128xf32>, vector<1x16x128xf32>, vector<1x16x128xf32>, vector<1x16x128xf32> -> vector<4x16x128xf32>
    %27 = vector.shape_cast %13 : vector<8x512xf32> to vector<1x8x512xf32>
    %28 = vector.extract_strided_slice %27 {offsets = [0, 0, 0], sizes = [1, 8, 128], strides = [1, 1, 1]} : vector<1x8x512xf32> to vector<1x8x128xf32>
    %29 = vector.extract_strided_slice %27 {offsets = [0, 0, 128], sizes = [1, 8, 128], strides = [1, 1, 1]} : vector<1x8x512xf32> to vector<1x8x128xf32>
    %30 = vector.extract_strided_slice %27 {offsets = [0, 0, 256], sizes = [1, 8, 128], strides = [1, 1, 1]} : vector<1x8x512xf32> to vector<1x8x128xf32>
    %31 = vector.extract_strided_slice %27 {offsets = [0, 0, 384], sizes = [1, 8, 128], strides = [1, 1, 1]} : vector<1x8x512xf32> to vector<1x8x128xf32>
    %32 = tpu.concatenate %28, %29, %30, %31 in 0 : vector<1x8x128xf32>, vector<1x8x128xf32>, vector<1x8x128xf32>, vector<1x8x128xf32> -> vector<4x8x128xf32>
    %33 = vector.shape_cast %20 : vector<8x512xf32> to vector<1x8x512xf32>
    %34 = vector.extract_strided_slice %33 {offsets = [0, 0, 0], sizes = [1, 8, 128], strides = [1, 1, 1]} : vector<1x8x512xf32> to vector<1x8x128xf32>
    %35 = vector.extract_strided_slice %33 {offsets = [0, 0, 128], sizes = [1, 8, 128], strides = [1, 1, 1]} : vector<1x8x512xf32> to vector<1x8x128xf32>
    %36 = vector.extract_strided_slice %33 {offsets = [0, 0, 256], sizes = [1, 8, 128], strides = [1, 1, 1]} : vector<1x8x512xf32> to vector<1x8x128xf32>
    %37 = vector.extract_strided_slice %33 {offsets = [0, 0, 384], sizes = [1, 8, 128], strides = [1, 1, 1]} : vector<1x8x512xf32> to vector<1x8x128xf32>
    %38 = tpu.concatenate %34, %35, %36, %37 in 0 : vector<1x8x128xf32>, vector<1x8x128xf32>, vector<1x8x128xf32>, vector<1x8x128xf32> -> vector<4x8x128xf32>
    "tpu.trace_start"() <{level = 10 : i32, message = "bqd,bkd->bqk"}> : () -> ()
    %cst_22 = arith.constant dense<0.000000e+00> : vector<4x16x8xf32>
    %39 = tpu.matmul %26, %32, %cst_22 {dimension_numbers = #tpu.dot_dimension_numbers<[2], [2], [1], [1], [0, 0, 0, 1, 1, 1], [0], [0]>} : vector<4x16x128xf32>, vector<4x8x128xf32>, vector<4x16x8xf32> -> vector<4x16x8xf32>
    "tpu.trace_stop"() : () -> ()
    %cst_23 = arith.constant dense<0xFF800000> : vector<4x16xf32>
    %40 = vector.multi_reduction <maximumf>, %39, %cst_23 [2] : vector<4x16x8xf32> to vector<4x16xf32>
    %41 = vector.shape_cast %40 : vector<4x16xf32> to vector<4x16x1xf32>
    %42 = vector.broadcast %41 : vector<4x16x1xf32> to vector<4x16x8xf32>
    %43 = arith.subf %39, %42 : vector<4x16x8xf32>
    %44 = math.exp %43 : vector<4x16x8xf32>
    %cst_24 = arith.constant dense<0.000000e+00> : vector<4x16xf32>
    %45 = vector.multi_reduction <add>, %44, %cst_24 [2] : vector<4x16x8xf32> to vector<4x16xf32>
    %46 = vector.shape_cast %45 : vector<4x16xf32> to vector<4x16x1xf32>
    "tpu.trace_start"() <{level = 10 : i32, message = "bqk,bkd->bqd"}> : () -> ()
    %cst_25 = arith.constant dense<0.000000e+00> : vector<4x16x128xf32>
    %47 = tpu.matmul %44, %38, %cst_25 {dimension_numbers = #tpu.dot_dimension_numbers<[2], [1], [1], [2], [0, 0, 0, 1, 1, 2], [0], [0]>} : vector<4x16x8xf32>, vector<4x8x128xf32>, vector<4x16x128xf32> -> vector<4x16x128xf32>
    "tpu.trace_stop"() : () -> ()
    %48 = tpu.reciprocal %46 {approx = true} : vector<4x16x1xf32> -> vector<4x16x1xf32>
    %49 = vector.broadcast %48 : vector<4x16x1xf32> to vector<4x16x128xf32>
    %50 = arith.mulf %47, %49 : vector<4x16x128xf32>
    %51 = vector.extract_strided_slice %50 {offsets = [0, 0, 0], sizes = [1, 16, 128], strides = [1, 1, 1]} : vector<4x16x128xf32> to vector<1x16x128xf32>
    %52 = vector.extract_strided_slice %50 {offsets = [1, 0, 0], sizes = [1, 16, 128], strides = [1, 1, 1]} : vector<4x16x128xf32> to vector<1x16x128xf32>
    %53 = vector.extract_strided_slice %50 {offsets = [2, 0, 0], sizes = [1, 16, 128], strides = [1, 1, 1]} : vector<4x16x128xf32> to vector<1x16x128xf32>
    %54 = vector.extract_strided_slice %50 {offsets = [3, 0, 0], sizes = [1, 16, 128], strides = [1, 1, 1]} : vector<4x16x128xf32> to vector<1x16x128xf32>
    %55 = tpu.concatenate %51, %52, %53, %54 in 2 : vector<1x16x128xf32>, vector<1x16x128xf32>, vector<1x16x128xf32>, vector<1x16x128xf32> -> vector<1x16x512xf32>
    %56 = vector.shape_cast %55 : vector<1x16x512xf32> to vector<16x512xf32>
    %c0_26 = arith.constant 0 : index
    %c0_27 = arith.constant 0 : index
    %57 = vector.load %arg10[%c0_26, %c0_27] : memref<512x128xf32, #tpu.memory_space<vmem>>, vector<512x128xf32>
    %cst_28 = arith.constant dense<0.000000e+00> : vector<16x128xf32>
    %58 = tpu.matmul %56, %57, %cst_28 {dimension_numbers = #tpu.dot_dimension_numbers<[1], [0], [0], [1], [0, 0, 1, 1], [], []>} : vector<16x512xf32>, vector<512x128xf32>, vector<16x128xf32> -> vector<16x128xf32>
    %c0_29 = arith.constant 0 : index
    %c0_30 = arith.constant 0 : index
    %59 = vector.load %arg11[%c0_29, %c0_30] : memref<1x128xf32, #tpu.memory_space<vmem>>, vector<1x128xf32>
    %60 = vector.broadcast %59 : vector<1x128xf32> to vector<16x128xf32>
    %61 = arith.addf %58, %60 : vector<16x128xf32>
    %62 = vector.shape_cast %61 : vector<16x128xf32> to vector<1x16x128xf32>
    %c0_31 = arith.constant 0 : index
    %c0_32 = arith.constant 0 : index
    %c0_33 = arith.constant 0 : index
    %63 = vector.load %arg12[%c0_31, %c0_32, %c0_33] : memref<1x16x128xf32, #tpu.memory_space<vmem>>, vector<1x16x128xf32>
    tpu.vector_store %arg12[%c0_31, %c0_32, %c0_33], %62 {strides = array<i32>} : memref<1x16x128xf32, #tpu.memory_space<vmem>>, vector<1x16x128xf32>,
    return
  }
  func.func @transform_0(%arg0: i32) -> (i32, i32, i32) {
    %c0_i32 = arith.constant 0 : i32
    %c0_i32_0 = arith.constant 0 : i32
    %c0_i32_1 = arith.constant 0 : i32
    return %arg0, %c0_i32, %c0_i32_0 : i32, i32, i32
  }
  func.func @transform_1(%arg0: i32) -> (i32, i32, i32) {
    %c0_i32 = arith.constant 0 : i32
    %c0_i32_0 = arith.constant 0 : i32
    %c0_i32_1 = arith.constant 0 : i32
    return %arg0, %c0_i32, %c0_i32_0 : i32, i32, i32
  }
  func.func @transform_2(%arg0: i32) -> (i32, i32, i32) {
    %c0_i32 = arith.constant 0 : i32
    %c0_i32_0 = arith.constant 0 : i32
    %c0_i32_1 = arith.constant 0 : i32
    return %arg0, %c0_i32, %c0_i32_0 : i32, i32, i32
  }
  func.func @transform_3(%arg0: i32) -> (i32, i32) {
    %c0_i32 = arith.constant 0 : i32
    %c0_i32_0 = arith.constant 0 : i32
    %c0_i32_1 = arith.constant 0 : i32
    return %c0_i32, %c0_i32_0 : i32, i32
  }
  func.func @transform_4(%arg0: i32) -> (i32, i32) {
    %c0_i32 = arith.constant 0 : i32
    %c0_i32_0 = arith.constant 0 : i32
    %c0_i32_1 = arith.constant 0 : i32
    return %c0_i32, %c0_i32_0 : i32, i32
  }
  func.func @transform_5(%arg0: i32) -> (i32, i32) {
    %c0_i32 = arith.constant 0 : i32
    %c0_i32_0 = arith.constant 0 : i32
    %c0_i32_1 = arith.constant 0 : i32
    return %c0_i32, %c0_i32_0 : i32, i32
  }
  func.func @transform_6(%arg0: i32) -> (i32, i32) {
    %c0_i32 = arith.constant 0 : i32
    %c0_i32_0 = arith.constant 0 : i32
    %c0_i32_1 = arith.constant 0 : i32
    return %c0_i32, %c0_i32_0 : i32, i32
  }
  func.func @transform_7(%arg0: i32) -> (i32, i32) {
    %c0_i32 = arith.constant 0 : i32
    %c0_i32_0 = arith.constant 0 : i32
    %c0_i32_1 = arith.constant 0 : i32
    return %c0_i32, %c0_i32_0 : i32, i32
  }
  func.func @transform_8(%arg0: i32) -> (i32, i32) {
    %c0_i32 = arith.constant 0 : i32
    %c0_i32_0 = arith.constant 0 : i32
    %c0_i32_1 = arith.constant 0 : i32
    return %c0_i32, %c0_i32_0 : i32, i32
  }
  func.func @transform_9(%arg0: i32) -> (i32, i32) {
    %c0_i32 = arith.constant 0 : i32
    %c0_i32_0 = arith.constant 0 : i32
    %c0_i32_1 = arith.constant 0 : i32
    return %c0_i32, %c0_i32_0 : i32, i32
  }
  func.func @transform_10(%arg0: i32) -> (i32, i32) {
    %c0_i32 = arith.constant 0 : i32
    %c0_i32_0 = arith.constant 0 : i32
    %c0_i32_1 = arith.constant 0 : i32
    return %c0_i32, %c0_i32_0 : i32, i32
  }
  func.func @transform_11(%arg0: i32) -> (i32, i32, i32) {
    %c0_i32 = arith.constant 0 : i32
    %c0_i32_0 = arith.constant 0 : i32
    %c0_i32_1 = arith.constant 0 : i32
    return %arg0, %c0_i32, %c0_i32_0 : i32, i32, i32
  }
}

</mosaic_0001>

<llo_original>
// kernel: tpu_custom_call.1
$region0: #{tpu_custom_call.1}
  #allocation0 [shape = 'u32[]', space=smem, size = 0x4, offset = 0x4, fixed_abs, tag = 'smem constant byte address 0x4 - core index']
  #allocation1 [shape = 'u32[72,128]{1,0:T(1,128)}', space=vmem, size = 0x9000, scoped, tag = 'internal scratch']
  %s0 = inlined_call_operand.hbm [shape: f32[2,16,32], index: 0, kind: input, shape index: {}]
  %s1 = inlined_call_operand.hbm [shape: f32[2,8,32], index: 1, kind: input, shape index: {}]
  %s2 = inlined_call_operand.hbm [shape: f32[2,8,32], index: 2, kind: input, shape index: {}]
  %s3 = inlined_call_operand.hbm [shape: f32[32,512], index: 3, kind: input, shape index: {}]
  %s4 = inlined_call_operand.hbm [shape: f32[1,512], index: 4, kind: input, shape index: {}]
  %s5 = inlined_call_operand.hbm [shape: f32[32,512], index: 5, kind: input, shape index: {}]
  %s6 = inlined_call_operand.vmem [shape: f32[1,512], index: 6, kind: input, shape index: {}]
  %s7 = inlined_call_operand.hbm [shape: f32[32,512], index: 7, kind: input, shape index: {}]
  %s8 = inlined_call_operand.hbm [shape: f32[1,512], index: 8, kind: input, shape index: {}]
  %s9 = inlined_call_operand.hbm [shape: f32[512,128], index: 9, kind: input, shape index: {}]
  %s10 = inlined_call_operand.vmem [shape: f32[1,128], index: 10, kind: input, shape index: {}]
  %s11 = inlined_call_operand.hbm [shape: f32[2,16,128], index: 11, kind: output, shape index: {}]
  %s12 = sld [smem:[#allocation0]]
  $region113: #{tpu_custom_call.1} parent=0
    _
  %s14 = ssub.s32 1, %s12
  %s15 = scalar_select 0, %s14, %s12
  $region1: #{tpu_custom_call.1} parent=0
    #allocation2 [shape = 'u8[16384]{0}', space=vmem, size = 0x4000, scoped, tag = 'input window, operand 0']
    #allocation3 [shape = 's32[2]{0}', space=sflag, size = 0x8, scoped, tag = 'scoped memory for tpu_custom_call.1']
    #allocation4 [shape = 's32[2]{0}', space=sflag, size = 0x8, scoped, tag = 'scoped memory for tpu_custom_call.1']
    #allocation5 [shape = 'u8[8192]{0}', space=vmem, size = 0x2000, scoped, tag = 'input window, operand 1']
    #allocation6 [shape = 's32[2]{0}', space=sflag, size = 0x8, scoped, tag = 'scoped memory for tpu_custom_call.1']
    #allocation7 [shape = 'u8[8192]{0}', space=vmem, size = 0x2000, scoped, tag = 'input window, operand 2']
    #allocation8 [shape = 'u8[65536]{0}', space=vmem, size = 0x10000, scoped, tag = 'input window, operand 3, single buffered']
    #allocation9 [shape = 's32[1]{0}', space=sflag, size = 0x4, scoped, tag = 'scoped memory for tpu_custom_call.1']
    #allocation10 [shape = 'u8[2048]{0}', space=vmem, size = 0x800, scoped, tag = 'input window, operand 4, single buffered']
    #allocation11 [shape = 'u8[65536]{0}', space=vmem, size = 0x10000, scoped, tag = 'input window, operand 5, single buffered']
    #allocation12 [shape = 's32[1]{0}', space=sflag, size = 0x4, scoped, tag = 'scoped memory for tpu_custom_call.1']
    #allocation13 [shape = 'u8[65536]{0}', space=vmem, size = 0x10000, scoped, tag = 'input window, operand 7, single buffered']
    #allocation14 [shape = 'u8[2048]{0}', space=vmem, size = 0x800, scoped, tag = 'input window, operand 8, single buffered']
    #allocation15 [shape = 's32[1]{0}', space=sflag, size = 0x4, scoped, tag = 'scoped memory for tpu_custom_call.1']
    #allocation16 [shape = 'u8[262144]{0}', space=vmem, size = 0x40000, scoped, tag = 'input window, operand 9, single buffered']
    #allocation17 [shape = 'u8[16384]{0}', space=vmem, size = 0x4000, scoped, tag = 'output window, operand 0']
    %16 = vsyncpa [#allocation3], 0
    %s17 = scalar_lea.sflag [#allocation3], 1
    %18 = vsyncpa %s17, 0
    %19 = vsyncpa [#allocation6], 0
    %s20 = scalar_lea.sflag [#allocation6], 1
    %21 = vsyncpa %s20, 0
    %22 = vsyncpa [#allocation9], 0
    %23 = vsyncpa [#allocation12], 0
    %24 = vsyncpa [#allocation15], 0
    %25 = vsyncpa [#allocation4], 0
    %s26 = scalar_lea.sflag [#allocation4], 1
    %27 = vsyncpa %s26, 0
    loop: start=0, step=1, limit=4
    $region2: #{tpu_custom_call.1} parent=1 // loop_pre_header
      _
    $region3: #{tpu_custom_call.1} parent=1 // loop_header
      %s29 = sphi 0, %s33
      %p30 = scmp.ge.s32.totalorder %s29, 4
      %s39 = sphi 0, %s41
      %s42 = sphi 0, %s39
      %s43 = sphi 0, %s42
      %s59 = sphi 0, %s43
      %s65 = sphi 0, %s67
      %s68 = sphi 0, %s65
      %s69 = sphi 0, %s68
      %s85 = sphi 0, %s69
      %s91 = sphi 0, %s93
      %s94 = sphi 0, %s91
      %s95 = sphi 0, %s94
      %s111 = sphi 0, %s95
      %s115 = sphi 0, %s115
      %s117 = sphi 0, %s115
      %s118 = sphi 0, %s117
      %s132 = sphi 0, %s118
      %s136 = sphi 0, %s136
      %s138 = sphi 0, %s136
      %s139 = sphi 0, %s138
      %s153 = sphi 0, %s139
      %s157 = sphi 0, %s157
      %s159 = sphi 0, %s157
      %s160 = sphi 0, %s159
      %s174 = sphi 0, %s160
      %s178 = sphi 0, %s178
      %s180 = sphi 0, %s178
      %s181 = sphi 0, %s180
      %s195 = sphi 0, %s181
      %s199 = sphi 0, %s199
      %s201 = sphi 0, %s199
      %s202 = sphi 0, %s201
      %s216 = sphi 0, %s202
      %s220 = sphi 0, %s220
      %s222 = sphi 0, %s220
      %s223 = sphi 0, %s222
      %s237 = sphi 0, %s223
      %s241 = sphi 0, %s241
      %s243 = sphi 0, %s241
      %s244 = sphi 0, %s243
      %s258 = sphi 0, %s244
      %s262 = sphi 0, %s262
      %s264 = sphi 0, %s262
      %s265 = sphi 0, %s264
      %s279 = sphi 0, %s265
      %s285 = sphi 0, %s287
      %s288 = sphi 0, %s285
      %s289 = sphi 0, %s288
      %s305 = sphi 0, %s289
    $region4: #{tpu_custom_call.1} parent=1 // loop_header_branch
      %32 = sbr.rel (%p30) target = $region8
    $region5: #{tpu_custom_call.1} parent=1 // loop_body
      %s34 = ssub.s32 %s29, 1
      %s35 = ssub.s32 %s29, 2
      %s36 = sadd.s32 %s29, 1
      %s37 = ssub.s32 %s29, %s36
      %p38 = scmp.eq.s32.totalorder %s37, 0
      %s40 = sadd.s32 %s39, 1
      %s41 = scalar_select %p38, %s39, %s40
      %p44 = pneg %p38
      %p45 = scmp.eq.s32.totalorder %s29, 1
      %p46 = por %p44, %p45
      %p47 = scmp.ne.s32.totalorder %s39, %s42
      %p48 = scmp.eq.s32.totalorder %s29, 0
      %p49 = por %p47, %p48
      %p50 = scmp.ne.s32.totalorder %s39, %s42
      %p51 = scmp.eq.s32.totalorder %s34, 1
      %p52 = por %p50, %p51
      %p53 = scmp.ne.s32.totalorder %s42, %s43
      %p54 = scmp.eq.s32.totalorder %s34, 0
      %p55 = por %p53, %p54
      %p56 = scmp.ne.s32.totalorder %s42, %s43
      %p57 = scmp.eq.s32.totalorder %s35, 1
      %p58 = por %p56, %p57
      %p60 = scmp.ne.s32.totalorder %s43, %s59
      %p61 = scmp.eq.s32.totalorder %s35, 0
      %p62 = por %p60, %p61
      %s63 = ssub.s32 %s29, %s36
      %p64 = scmp.eq.s32.totalorder %s63, 0
      %s66 = sadd.s32 %s65, 1
      %s67 = scalar_select %p64, %s65, %s66
      %p70 = pneg %p64
      %p71 = scmp.eq.s32.totalorder %s29, 1
      %p72 = por %p70, %p71
      %p73 = scmp.ne.s32.totalorder %s65, %s68
      %p74 = scmp.eq.s32.totalorder %s29, 0
      %p75 = por %p73, %p74
      %p76 = scmp.ne.s32.totalorder %s65, %s68
      %p77 = scmp.eq.s32.totalorder %s34, 1
      %p78 = por %p76, %p77
      %p79 = scmp.ne.s32.totalorder %s68, %s69
      %p80 = scmp.eq.s32.totalorder %s34, 0
      %p81 = por %p79, %p80
      %p82 = scmp.ne.s32.totalorder %s68, %s69
      %p83 = scmp.eq.s32.totalorder %s35, 1
      %p84 = por %p82, %p83
      %p86 = scmp.ne.s32.totalorder %s69, %s85
      %p87 = scmp.eq.s32.totalorder %s35, 0
      %p88 = por %p86, %p87
      %s89 = ssub.s32 %s29, %s36
      %p90 = scmp.eq.s32.totalorder %s89, 0
      %s92 = sadd.s32 %s91, 1
      %s93 = scalar_select %p90, %s91, %s92
      %p96 = pneg %p90
      %p97 = scmp.eq.s32.totalorder %s29, 1
      %p98 = por %p96, %p97
      %p99 = scmp.ne.s32.totalorder %s91, %s94
      %p100 = scmp.eq.s32.totalorder %s29, 0
      %p101 = por %p99, %p100
      %p102 = scmp.ne.s32.totalorder %s91, %s94
      %p103 = scmp.eq.s32.totalorder %s34, 1
      %p104 = por %p102, %p103
      %p105 = scmp.ne.s32.totalorder %s94, %s95
      %p106 = scmp.eq.s32.totalorder %s34, 0
      %p107 = por %p105, %p106
      %p108 = scmp.ne.s32.totalorder %s94, %s95
      %p109 = scmp.eq.s32.totalorder %s35, 1
      %p110 = por %p108, %p109
      %p112 = scmp.ne.s32.totalorder %s95, %s111
      %p113 = scmp.eq.s32.totalorder %s35, 0
      %p114 = por %p112, %p113
      %s116 = sadd.s32 %s115, 1
      %p119 = scmp.eq.s32.totalorder %s29, 1
      %p120 = scmp.ne.s32.totalorder %s115, %s117
      %p121 = scmp.eq.s32.totalorder %s29, 0
      %p122 = por %p120, %p121
      %p123 = scmp.ne.s32.totalorder %s115, %s117
      %p124 = scmp.eq.s32.totalorder %s34, 1
      %p125 = por %p123, %p124
      %p126 = scmp.ne.s32.totalorder %s117, %s118
      %p127 = scmp.eq.s32.totalorder %s34, 0
      %p128 = por %p126, %p127
      %p129 = scmp.ne.s32.totalorder %s117, %s118
      %p130 = scmp.eq.s32.totalorder %s35, 1
      %p131 = por %p129, %p130
      %p133 = scmp.ne.s32.totalorder %s118, %s132
      %p134 = scmp.eq.s32.totalorder %s35, 0
      %p135 = por %p133, %p134
      %s137 = sadd.s32 %s136, 1
      %p140 = scmp.eq.s32.totalorder %s29, 1
      %p141 = scmp.ne.s32.totalorder %s136, %s138
      %p142 = scmp.eq.s32.totalorder %s29, 0
      %p143 = por %p141, %p142
      %p144 = scmp.ne.s32.totalorder %s136, %s138
      %p145 = scmp.eq.s32.totalorder %s34, 1
      %p146 = por %p144, %p145
      %p147 = scmp.ne.s32.totalorder %s138, %s139
      %p148 = scmp.eq.s32.totalorder %s34, 0
      %p149 = por %p147, %p148
      %p150 = scmp.ne.s32.totalorder %s138, %s139
      %p151 = scmp.eq.s32.totalorder %s35, 1
      %p152 = por %p150, %p151
      %p154 = scmp.ne.s32.totalorder %s139, %s153
      %p155 = scmp.eq.s32.totalorder %s35, 0
      %p156 = por %p154, %p155
      %s158 = sadd.s32 %s157, 1
      %p161 = scmp.eq.s32.totalorder %s29, 1
      %p162 = scmp.ne.s32.totalorder %s157, %s159
      %p163 = scmp.eq.s32.totalorder %s29, 0
      %p164 = por %p162, %p163
      %p165 = scmp.ne.s32.totalorder %s157, %s159
      %p166 = scmp.eq.s32.totalorder %s34, 1
      %p167 = por %p165, %p166
      %p168 = scmp.ne.s32.totalorder %s159, %s160
      %p169 = scmp.eq.s32.totalorder %s34, 0
      %p170 = por %p168, %p169
      %p171 = scmp.ne.s32.totalorder %s159, %s160
      %p172 = scmp.eq.s32.totalorder %s35, 1
      %p173 = por %p171, %p172
      %p175 = scmp.ne.s32.totalorder %s160, %s174
      %p176 = scmp.eq.s32.totalorder %s35, 0
      %p177 = por %p175, %p176
      %s179 = sadd.s32 %s178, 1
      %p182 = scmp.eq.s32.totalorder %s29, 1
      %p183 = scmp.ne.s32.totalorder %s178, %s180
      %p184 = scmp.eq.s32.totalorder %s29, 0
      %p185 = por %p183, %p184
      %p186 = scmp.ne.s32.totalorder %s178, %s180
      %p187 = scmp.eq.s32.totalorder %s34, 1
      %p188 = por %p186, %p187
      %p189 = scmp.ne.s32.totalorder %s180, %s181
      %p190 = scmp.eq.s32.totalorder %s34, 0
      %p191 = por %p189, %p190
      %p192 = scmp.ne.s32.totalorder %s180, %s181
      %p193 = scmp.eq.s32.totalorder %s35, 1
      %p194 = por %p192, %p193
      %p196 = scmp.ne.s32.totalorder %s181, %s195
      %p197 = scmp.eq.s32.totalorder %s35, 0
      %p198 = por %p196, %p197
      %s200 = sadd.s32 %s199, 1
      %p203 = scmp.eq.s32.totalorder %s29, 1
      %p204 = scmp.ne.s32.totalorder %s199, %s201
      %p205 = scmp.eq.s32.totalorder %s29, 0
      %p206 = por %p204, %p205
      %p207 = scmp.ne.s32.totalorder %s199, %s201
      %p208 = scmp.eq.s32.totalorder %s34, 1
      %p209 = por %p207, %p208
      %p210 = scmp.ne.s32.totalorder %s201, %s202
      %p211 = scmp.eq.s32.totalorder %s34, 0
      %p212 = por %p210, %p211
      %p213 = scmp.ne.s32.totalorder %s201, %s202
      %p214 = scmp.eq.s32.totalorder %s35, 1
      %p215 = por %p213, %p214
      %p217 = scmp.ne.s32.totalorder %s202, %s216
      %p218 = scmp.eq.s32.totalorder %s35, 0
      %p219 = por %p217, %p218
      %s221 = sadd.s32 %s220, 1
      %p224 = scmp.eq.s32.totalorder %s29, 1
      %p225 = scmp.ne.s32.totalorder %s220, %s222
      %p226 = scmp.eq.s32.totalorder %s29, 0
      %p227 = por %p225, %p226
      %p228 = scmp.ne.s32.totalorder %s220, %s222
      %p229 = scmp.eq.s32.totalorder %s34, 1
      %p230 = por %p228, %p229
      %p231 = scmp.ne.s32.totalorder %s222, %s223
      %p232 = scmp.eq.s32.totalorder %s34, 0
      %p233 = por %p231, %p232
      %p234 = scmp.ne.s32.totalorder %s222, %s223
      %p235 = scmp.eq.s32.totalorder %s35, 1
      %p236 = por %p234, %p235
      %p238 = scmp.ne.s32.totalorder %s223, %s237
      %p239 = scmp.eq.s32.totalorder %s35, 0
      %p240 = por %p238, %p239
      %s242 = sadd.s32 %s241, 1
      %p245 = scmp.eq.s32.totalorder %s29, 1
      %p246 = scmp.ne.s32.totalorder %s241, %s243
      %p247 = scmp.eq.s32.totalorder %s29, 0
      %p248 = por %p246, %p247
      %p249 = scmp.ne.s32.totalorder %s241, %s243
      %p250 = scmp.eq.s32.totalorder %s34, 1
      %p251 = por %p249, %p250
      %p252 = scmp.ne.s32.totalorder %s243, %s244
      %p253 = scmp.eq.s32.totalorder %s34, 0
      %p254 = por %p252, %p253
      %p255 = scmp.ne.s32.totalorder %s243, %s244
      %p256 = scmp.eq.s32.totalorder %s35, 1
      %p257 = por %p255, %p256
      %p259 = scmp.ne.s32.totalorder %s244, %s258
      %p260 = scmp.eq.s32.totalorder %s35, 0
      %p261 = por %p259, %p260
      %s263 = sadd.s32 %s262, 1
      %p266 = scmp.eq.s32.totalorder %s29, 1
      %p267 = scmp.ne.s32.totalorder %s262, %s264
      %p268 = scmp.eq.s32.totalorder %s29, 0
      %p269 = por %p267, %p268
      %p270 = scmp.ne.s32.totalorder %s262, %s264
      %p271 = scmp.eq.s32.totalorder %s34, 1
      %p272 = por %p270, %p271
      %p273 = scmp.ne.s32.totalorder %s264, %s265
      %p274 = scmp.eq.s32.totalorder %s34, 0
      %p275 = por %p273, %p274
      %p276 = scmp.ne.s32.totalorder %s264, %s265
      %p277 = scmp.eq.s32.totalorder %s35, 1
      %p278 = por %p276, %p277
      %p280 = scmp.ne.s32.totalorder %s265, %s279
      %p281 = scmp.eq.s32.totalorder %s35, 0
      %p282 = por %p280, %p281
      %s283 = ssub.s32 %s29, %s36
      %p284 = scmp.eq.s32.totalorder %s283, 0
      %s286 = sadd.s32 %s285, 1
      %s287 = scalar_select %p284, %s285, %s286
      %p290 = pneg %p284
      %p291 = scmp.eq.s32.totalorder %s29, 1
      %p292 = por %p290, %p291
      %p293 = scmp.ne.s32.totalorder %s285, %s288
      %p294 = scmp.eq.s32.totalorder %s29, 0
      %p295 = por %p293, %p294
      %p296 = scmp.ne.s32.totalorder %s285, %s288
      %p297 = scmp.eq.s32.totalorder %s34, 1
      %p298 = por %p296, %p297
      %p299 = scmp.ne.s32.totalorder %s288, %s289
      %p300 = scmp.eq.s32.totalorder %s34, 0
      %p301 = por %p299, %p300
      %p302 = scmp.ne.s32.totalorder %s288, %s289
      %p303 = scmp.eq.s32.totalorder %s35, 1
      %p304 = por %p302, %p303
      %p306 = scmp.ne.s32.totalorder %s289, %s305
      %p307 = scmp.eq.s32.totalorder %s35, 0
      %p308 = por %p306, %p307
      %p309 = scmp.le.s32.totalorder 1, %s29
      %p310 = scmp.lt.s32.totalorder %s29, 3
      %p311 = pnand %p309, %p310
      %p312 = pneg %p311
      // Predicated region
      $region9: #{tpu_custom_call.1} parent=5 // pred_check
        _
      $region10: #{tpu_custom_call.1} parent=5 // pred_check_branch
        %314 = sbr.rel (%p311) target = $region12
      $region11: #{tpu_custom_call.1} parent=5 // pred_region
        %s315 = ssub.s32 %s29, 1
        // Predicated region
        $region13: #{tpu_custom_call.1} parent=11 // pred_check
          %p316 = pneg %p128
        $region14: #{tpu_custom_call.1} parent=11 // pred_check_branch
          %318 = sbr.rel (%p316) target = $region16
        $region15: #{tpu_custom_call.1} parent=11 // pred_region
          %320 = vsyncadd [#allocation9], 0
          %s321 = sshll.u32 %s3, 4
          %s322 = int_to_ptr.hbm [resolvable:$true] %s321
          %s323 = sshll.u32 [#allocation8], 4
          %s324 = int_to_ptr.vmem [resolvable:$true] %s323
          %329 = dma.hbm_to_vmem [thread:$0]  %s322, 2048, %s324, [#allocation9], 512, 512, 32
        $region16: #{tpu_custom_call.1} parent=11 // pred_fallthru
          _
        // Predicated region
        $region17: #{tpu_custom_call.1} parent=11 // pred_check
          %p330 = pneg %p149
        $region18: #{tpu_custom_call.1} parent=11 // pred_check_branch
          %332 = sbr.rel (%p330) target = $region20
        $region19: #{tpu_custom_call.1} parent=11 // pred_region
          %334 = vsyncadd [#allocation9], 0
          %s336 = sshll.u32 %s4, 4
          %s337 = int_to_ptr.hbm [resolvable:$true] %s336
          %s338 = sshll.u32 [#allocation10], 4
          %s339 = int_to_ptr.vmem [resolvable:$true] %s338
          %341 = dma.hbm_to_vmem [thread:$0]  %s337, 64, %s339, [#allocation9]
        $region20: #{tpu_custom_call.1} parent=11 // pred_fallthru
          _
        // Predicated region
        $region21: #{tpu_custom_call.1} parent=11 // pred_check
          %p342 = pneg %p170
        $region22: #{tpu_custom_call.1} parent=11 // pred_check_branch
          %344 = sbr.rel (%p342) target = $region24
        $region23: #{tpu_custom_call.1} parent=11 // pred_region
          %346 = vsyncadd [#allocation12], 0
          %s347 = sshll.u32 %s5, 4
          %s348 = int_to_ptr.hbm [resolvable:$true] %s347
          %s349 = sshll.u32 [#allocation11], 4
          %s350 = int_to_ptr.vmem [resolvable:$true] %s349
          %355 = dma.hbm_to_vmem [thread:$0]  %s348, 2048, %s350, [#allocation12], 512, 512, 32
        $region24: #{tpu_custom_call.1} parent=11 // pred_fallthru
          _
        // Predicated region
        $region25: #{tpu_custom_call.1} parent=11 // pred_check
          %p356 = pneg %p191
        $region26: #{tpu_custom_call.1} parent=11 // pred_check_branch
          %358 = sbr.rel (%p356) target = $region28
        $region27: #{tpu_custom_call.1} parent=11 // pred_region
          _
        $region28: #{tpu_custom_call.1} parent=11 // pred_fallthru
          _
        // Predicated region
        $region29: #{tpu_custom_call.1} parent=11 // pred_check
          %p359 = pneg %p212
        $region30: #{tpu_custom_call.1} parent=11 // pred_check_branch
          %361 = sbr.rel (%p359) target = $region32
        $region31: #{tpu_custom_call.1} parent=11 // pred_region
          %363 = vsyncadd [#allocation12], 0
          %s364 = sshll.u32 %s7, 4
          %s365 = int_to_ptr.hbm [resolvable:$true] %s364
          %s366 = sshll.u32 [#allocation13], 4
          %s367 = int_to_ptr.vmem [resolvable:$true] %s366
          %372 = dma.hbm_to_vmem [thread:$0]  %s365, 2048, %s367, [#allocation12], 512, 512, 32
        $region32: #{tpu_custom_call.1} parent=11 // pred_fallthru
          _
        // Predicated region
        $region33: #{tpu_custom_call.1} parent=11 // pred_check
          %p373 = pneg %p233
        $region34: #{tpu_custom_call.1} parent=11 // pred_check_branch
          %375 = sbr.rel (%p373) target = $region36
        $region35: #{tpu_custom_call.1} parent=11 // pred_region
          %377 = vsyncadd [#allocation15], 0
          %s379 = sshll.u32 %s8, 4
          %s380 = int_to_ptr.hbm [resolvable:$true] %s379
          %s381 = sshll.u32 [#allocation14], 4
          %s382 = int_to_ptr.vmem [resolvable:$true] %s381
          %384 = dma.hbm_to_vmem [thread:$0]  %s380, 64, %s382, [#allocation15]
        $region36: #{tpu_custom_call.1} parent=11 // pred_fallthru
          _
        // Predicated region
        $region37: #{tpu_custom_call.1} parent=11 // pred_check
          %p385 = pneg %p254
        $region38: #{tpu_custom_call.1} parent=11 // pred_check_branch
          %387 = sbr.rel (%p385) target = $region40
        $region39: #{tpu_custom_call.1} parent=11 // pred_region
          %389 = vsyncadd [#allocation15], 0
          %s390 = sshll.u32 %s9, 4
          %s391 = int_to_ptr.hbm [resolvable:$true] %s390
          %s392 = sshll.u32 [#allocation16], 4
          %s393 = int_to_ptr.vmem [resolvable:$true] %s392
          %398 = dma.hbm_to_vmem [thread:$0]  %s391, 8192, %s393, [#allocation15], 128, 128, 8
        $region40: #{tpu_custom_call.1} parent=11 // pred_fallthru
          _
        // Predicated region
        $region41: #{tpu_custom_call.1} parent=11 // pred_check
          %p399 = pneg %p275
        $region42: #{tpu_custom_call.1} parent=11 // pred_check_branch
          %401 = sbr.rel (%p399) target = $region44
        $region43: #{tpu_custom_call.1} parent=11 // pred_region
          _
        $region44: #{tpu_custom_call.1} parent=11 // pred_fallthru
          _
      $region12: #{tpu_custom_call.1} parent=5 // pred_fallthru
        _
      %p402 = scmp.lt.s32.totalorder %s29, 2
      // Predicated region
      $region45: #{tpu_custom_call.1} parent=5 // pred_check
        %p403 = pneg %p402
      $region46: #{tpu_custom_call.1} parent=5 // pred_check_branch
        %405 = sbr.rel (%p403) target = $region48
      $region47: #{tpu_custom_call.1} parent=5 // pred_region
        // Predicated region
        $region49: #{tpu_custom_call.1} parent=47 // pred_check
          %p406 = pneg %p49
        $region50: #{tpu_custom_call.1} parent=47 // pred_check_branch
          %408 = sbr.rel (%p406) target = $region52
        $region51: #{tpu_custom_call.1} parent=47 // pred_region
          %s409 = sand.u32 %s39, 1
          %s410 = scalar_lea.sflag [#allocation3], %s409
          %s411 = sand.u32 %s39, 1
          %s412 = smul.addr %s411, 16
          %s413 = scalar_lea.vmem [#allocation2], %s412
          %415 = vsyncadd %s410, 0
          %s416 = smul.addr %s29, 2
          %s417 = smul.addr %s416, 8
          %s418 = scalar_lea.hbm %s0, %s417
          %s419 = sshll.u32 %s418, 4
          %s420 = int_to_ptr.hbm [resolvable:$true] %s419
          %s421 = sshll.u32 %s413, 4
          %s422 = int_to_ptr.vmem [resolvable:$true] %s421
          %427 = dma.hbm_to_vmem [thread:$0]  %s420, 256, %s422, %s410, 128, 128, 8
        $region52: #{tpu_custom_call.1} parent=47 // pred_fallthru
          _
        // Predicated region
        $region53: #{tpu_custom_call.1} parent=47 // pred_check
          %p428 = pneg %p75
        $region54: #{tpu_custom_call.1} parent=47 // pred_check_branch
          %430 = sbr.rel (%p428) target = $region56
        $region55: #{tpu_custom_call.1} parent=47 // pred_region
          %s431 = sand.u32 %s29, 1
          %s432 = scalar_lea.sflag [#allocation6], %s431
          %s433 = sand.u32 %s65, 1
          %s434 = smul.addr %s433, 8
          %s435 = scalar_lea.vmem [#allocation5], %s434
          %437 = vsyncadd %s432, 0
          %s438 = smul.addr %s29, 8
          %s439 = scalar_lea.hbm %s1, %s438
          %s441 = sshll.u32 %s439, 4
          %s442 = int_to_ptr.hbm [resolvable:$true] %s441
          %s443 = sshll.u32 %s435, 4
          %s444 = int_to_ptr.vmem [resolvable:$true] %s443
          %446 = dma.hbm_to_vmem [thread:$0]  %s442, 128, %s444, %s432
        $region56: #{tpu_custom_call.1} parent=47 // pred_fallthru
          _
        // Predicated region
        $region57: #{tpu_custom_call.1} parent=47 // pred_check
          %p447 = pneg %p101
        $region58: #{tpu_custom_call.1} parent=47 // pred_check_branch
          %449 = sbr.rel (%p447) target = $region60
        $region59: #{tpu_custom_call.1} parent=47 // pred_region
          %s450 = sand.u32 %s29, 1
          %s451 = scalar_lea.sflag [#allocation6], %s450
          %s452 = sand.u32 %s91, 1
          %s453 = smul.addr %s452, 8
          %s454 = scalar_lea.vmem [#allocation7], %s453
          %456 = vsyncadd %s451, 0
          %s457 = smul.addr %s29, 8
          %s458 = scalar_lea.hbm %s2, %s457
          %s460 = sshll.u32 %s458, 4
          %s461 = int_to_ptr.hbm [resolvable:$true] %s460
          %s462 = sshll.u32 %s454, 4
          %s463 = int_to_ptr.vmem [resolvable:$true] %s462
          %465 = dma.hbm_to_vmem [thread:$0]  %s461, 128, %s463, %s451
        $region60: #{tpu_custom_call.1} parent=47 // pred_fallthru
          _
      $region48: #{tpu_custom_call.1} parent=5 // pred_fallthru
        _
      %p466 = scmp.le.s32.totalorder 1, %s29
      %p467 = scmp.lt.s32.totalorder %s29, 3
      %p468 = pnand %p466, %p467
      %p469 = pneg %p468
      // Predicated region
      $region61: #{tpu_custom_call.1} parent=5 // pred_check
        _
      $region62: #{tpu_custom_call.1} parent=5 // pred_check_branch
        %471 = sbr.rel (%p468) target = $region64
      $region63: #{tpu_custom_call.1} parent=5 // pred_region
        %s472 = ssub.s32 %s29, 1
        %s473 = sand.u32 %s42, 1
        %s474 = scalar_lea.sflag [#allocation3], %s473
        %s475 = sand.u32 %s42, 1
        %s476 = smul.addr %s475, 16
        %s477 = scalar_lea.vmem [#allocation2], %s476
        // Predicated region
        $region65: #{tpu_custom_call.1} parent=63 // pred_check
          %p478 = pneg %p55
        $region66: #{tpu_custom_call.1} parent=63 // pred_check_branch
          %480 = sbr.rel (%p478) target = $region68
        $region67: #{tpu_custom_call.1} parent=63 // pred_region
          %482 = dma.done %s474, 256
        $region68: #{tpu_custom_call.1} parent=63 // pred_fallthru
          _
        %s483 = sand.u32 %s34, 1
        %s484 = scalar_lea.sflag [#allocation6], %s483
        %s485 = sand.u32 %s68, 1
        %s486 = smul.addr %s485, 8
        %s487 = scalar_lea.vmem [#allocation5], %s486
        // Predicated region
        $region69: #{tpu_custom_call.1} parent=63 // pred_check
          %p488 = pneg %p81
        $region70: #{tpu_custom_call.1} parent=63 // pred_check_branch
          %490 = sbr.rel (%p488) target = $region72
        $region71: #{tpu_custom_call.1} parent=63 // pred_region
          %492 = dma.done %s484, 128
        $region72: #{tpu_custom_call.1} parent=63 // pred_fallthru
          _
        %s493 = sand.u32 %s34, 1
        %s494 = scalar_lea.sflag [#allocation6], %s493
        %s495 = sand.u32 %s94, 1
        %s496 = smul.addr %s495, 8
        %s497 = scalar_lea.vmem [#allocation7], %s496
        // Predicated region
        $region73: #{tpu_custom_call.1} parent=63 // pred_check
          %p498 = pneg %p107
        $region74: #{tpu_custom_call.1} parent=63 // pred_check_branch
          %500 = sbr.rel (%p498) target = $region76
        $region75: #{tpu_custom_call.1} parent=63 // pred_region
          %502 = dma.done %s494, 128
        $region76: #{tpu_custom_call.1} parent=63 // pred_fallthru
          _
        // Predicated region
        $region77: #{tpu_custom_call.1} parent=63 // pred_check
          %p503 = pneg %p128
        $region78: #{tpu_custom_call.1} parent=63 // pred_check_branch
          %505 = sbr.rel (%p503) target = $region80
        $region79: #{tpu_custom_call.1} parent=63 // pred_region
          %507 = dma.done [#allocation9], 2048
        $region80: #{tpu_custom_call.1} parent=63 // pred_fallthru
          _
        // Predicated region
        $region81: #{tpu_custom_call.1} parent=63 // pred_check
          %p508 = pneg %p149
        $region82: #{tpu_custom_call.1} parent=63 // pred_check_branch
          %510 = sbr.rel (%p508) target = $region84
        $region83: #{tpu_custom_call.1} parent=63 // pred_region
          %512 = dma.done [#allocation9], 64
        $region84: #{tpu_custom_call.1} parent=63 // pred_fallthru
          _
        // Predicated region
        $region85: #{tpu_custom_call.1} parent=63 // pred_check
          %p513 = pneg %p170
        $region86: #{tpu_custom_call.1} parent=63 // pred_check_branch
          %515 = sbr.rel (%p513) target = $region88
        $region87: #{tpu_custom_call.1} parent=63 // pred_region
          %517 = dma.done [#allocation12], 2048
        $region88: #{tpu_custom_call.1} parent=63 // pred_fallthru
          _
        // Predicated region
        $region89: #{tpu_custom_call.1} parent=63 // pred_check
          %p518 = pneg %p212
        $region90: #{tpu_custom_call.1} parent=63 // pred_check_branch
          %520 = sbr.rel (%p518) target = $region92
        $region91: #{tpu_custom_call.1} parent=63 // pred_region
          %522 = dma.done [#allocation12], 2048
        $region92: #{tpu_custom_call.1} parent=63 // pred_fallthru
          _
        // Predicated region
        $region93: #{tpu_custom_call.1} parent=63 // pred_check
          %p523 = pneg %p233
        $region94: #{tpu_custom_call.1} parent=63 // pred_check_branch
          %525 = sbr.rel (%p523) target = $region96
        $region95: #{tpu_custom_call.1} parent=63 // pred_region
          %527 = dma.done [#allocation15], 64
        $region96: #{tpu_custom_call.1} parent=63 // pred_fallthru
          _
        // Predicated region
        $region97: #{tpu_custom_call.1} parent=63 // pred_check
          %p528 = pneg %p254
        $region98: #{tpu_custom_call.1} parent=63 // pred_check_branch
          %530 = sbr.rel (%p528) target = $region100
        $region99: #{tpu_custom_call.1} parent=63 // pred_region
          %532 = dma.done [#allocation15], 8192
        $region100: #{tpu_custom_call.1} parent=63 // pred_fallthru
          _
        %s533 = sand.u32 %s42, 1
        %s534 = scalar_lea.sflag [#allocation3], %s533
        %s535 = sand.u32 %s42, 1
        %s536 = smul.addr %s535, 16
        %s537 = scalar_lea.vmem [#allocation2], %s536
        %p538 = pneg %p55
        %p539 = pneg %p52
        %s540 = sand.u32 %s34, 1
        %s541 = scalar_lea.sflag [#allocation6], %s540
        %s542 = sand.u32 %s68, 1
        %s543 = smul.addr %s542, 8
        %s544 = scalar_lea.vmem [#allocation5], %s543
        %p545 = pneg %p81
        %p546 = pneg %p78
        %s547 = sand.u32 %s34, 1
        %s548 = scalar_lea.sflag [#allocation6], %s547
        %s549 = sand.u32 %s94, 1
        %s550 = smul.addr %s549, 8
        %s551 = scalar_lea.vmem [#allocation7], %s550
        %p552 = pneg %p107
        %p553 = pneg %p104
        %p554 = pneg %p128
        %p555 = pneg %p125
        %p556 = pneg %p149
        %p557 = pneg %p146
        %p558 = pneg %p170
        %p559 = pneg %p167
        %p560 = pneg %p191
        %p561 = pneg %p188
        %p562 = pneg %p212
        %p563 = pneg %p209
        %p564 = pneg %p233
        %p565 = pneg %p230
        %p566 = pneg %p254
        %p567 = pneg %p251
        %p568 = pneg %p275
        %p569 = pneg %p272
        %p570 = pneg %p301
        %p571 = pneg %p298
        %s572 = sand.u32 %s288, 1
        %s573 = scalar_lea.sflag [#allocation4], %s572
        %s574 = sand.u32 %s288, 1
        %s575 = smul.addr %s574, 16
        %s576 = scalar_lea.vmem [#allocation17], %s575
        %v577 = vld [vmem:[%s477] sm:$0xff]
        %v578 = vld [vmem:[%s477 + $0x8] sm:$0xff]
        %v579 = vld [vmem:[#allocation8] sm:$0xff]
        %v580 = vld [vmem:[#allocation8 + $0x8] sm:$0xff]
        %v581 = vld [vmem:[#allocation8 + $0x10] sm:$0xff]
        %v582 = vld [vmem:[#allocation8 + $0x18] sm:$0xff]
        %v583 = vld [vmem:[#allocation8 + $0x20] sm:$0xff]
        %v584 = vld [vmem:[#allocation8 + $0x28] sm:$0xff]
        %v585 = vld [vmem:[#allocation8 + $0x30] sm:$0xff]
        %v586 = vld [vmem:[#allocation8 + $0x38] sm:$0xff]
        %v587 = vld [vmem:[#allocation8 + $0x40] sm:$0xff]
        %v588 = vld [vmem:[#allocation8 + $0x48] sm:$0xff]
        %v589 = vld [vmem:[#allocation8 + $0x50] sm:$0xff]
        %v590 = vld [vmem:[#allocation8 + $0x58] sm:$0xff]
        %v591 = vld [vmem:[#allocation8 + $0x60] sm:$0xff]
        %v592 = vld [vmem:[#allocation8 + $0x68] sm:$0xff]
        %v593 = vld [vmem:[#allocation8 + $0x70] sm:$0xff]
        %v594 = vld [vmem:[#allocation8 + $0x78] sm:$0xff]
        %v595 = vld [vmem:[#allocation10] sm:$0xf]
        %v597 = vperm.slane %v595, 0
        %v598 = vperm.slane %v595, 1
        %v599 = vperm.slane %v595, 2
        %v600 = vperm.slane %v595, 3
        %vm605 = vcmask 261120
        %v607 = vsel %vm605, %v577, 0
        %v610 = vsel %vm605, %v578, 0
        %612 = vmatpush.msra.mxu0 0.0
        %613 = vmatpush.msra.mxu0 0.0
        %614 = vmatpush.msra.mxu0 0.0
        %615 = vmatpush.msra.mxu0 0.0
        %616 = vmatpush.msra.mxu0 0.0
        %617 = vmatpush.msra.mxu0 0.0
        %618 = vmatpush.msra.mxu0 0.0
        %619 = vmatpush.msra.mxu0 0.0
        %620 = vmatpush.msra.mxu0 0.0
        %621 = vmatpush.msra.mxu0 0.0
        %622 = vmatpush.msra.mxu0 0.0
        %623 = vmatpush.msra.mxu0 0.0
        %624 = vmatpush.msra.mxu0 %v591
        %625 = vmatpush.msra.mxu0 %v587
        %626 = vmatpush.msra.mxu0 %v583
        %627 = vmatpush.msra.mxu0 %v579
        %628 = vmatmul.f32.gmra.mxu0 %v607
        %v629 = vpop.f32.mrf.mxu0
        %v630 = vadd.f32 %v597, %v629
        %631 = vmatmul.f32.gmra.mxu0 %v610
        %v632 = vpop.f32.mrf.mxu0
        %v633 = vadd.f32 %v597, %v632
        %634 = vdwg.mxu0
        %635 = vmatpush.msra.mxu0 0.0
        %636 = vmatpush.msra.mxu0 0.0
        %637 = vmatpush.msra.mxu0 0.0
        %638 = vmatpush.msra.mxu0 0.0
        %639 = vmatpush.msra.mxu0 0.0
        %640 = vmatpush.msra.mxu0 0.0
        %641 = vmatpush.msra.mxu0 0.0
        %642 = vmatpush.msra.mxu0 0.0
        %643 = vmatpush.msra.mxu0 0.0
        %644 = vmatpush.msra.mxu0 0.0
        %645 = vmatpush.msra.mxu0 0.0
        %646 = vmatpush.msra.mxu0 0.0
        %647 = vmatpush.msra.mxu0 %v592
        %648 = vmatpush.msra.mxu0 %v588
        %649 = vmatpush.msra.mxu0 %v584
        %650 = vmatpush.msra.mxu0 %v580
        %651 = vmatmul.f32.gmra.mxu0 %v607
        %v652 = vpop.f32.mrf.mxu0
        %v653 = vadd.f32 %v598, %v652
        %654 = vmatmul.f32.gmra.mxu0 %v610
        %v655 = vpop.f32.mrf.mxu0
        %v656 = vadd.f32 %v598, %v655
        %657 = vdwg.mxu0
        %658 = vmatpush.msra.mxu0 0.0
        %659 = vmatpush.msra.mxu0 0.0
        %660 = vmatpush.msra.mxu0 0.0
        %661 = vmatpush.msra.mxu0 0.0
        %662 = vmatpush.msra.mxu0 0.0
        %663 = vmatpush.msra.mxu0 0.0
        %664 = vmatpush.msra.mxu0 0.0
        %665 = vmatpush.msra.mxu0 0.0
        %666 = vmatpush.msra.mxu0 0.0
        %667 = vmatpush.msra.mxu0 0.0
        %668 = vmatpush.msra.mxu0 0.0
        %669 = vmatpush.msra.mxu0 0.0
        %670 = vmatpush.msra.mxu0 %v593
        %671 = vmatpush.msra.mxu0 %v589
        %672 = vmatpush.msra.mxu0 %v585
        %673 = vmatpush.msra.mxu0 %v581
        %674 = vmatmul.f32.gmra.mxu0 %v607
        %v675 = vpop.f32.mrf.mxu0
        %v676 = vadd.f32 %v599, %v675
        %677 = vmatmul.f32.gmra.mxu0 %v610
        %v678 = vpop.f32.mrf.mxu0
        %v679 = vadd.f32 %v599, %v678
        %680 = vdwg.mxu0
        %681 = vmatpush.msra.mxu0 0.0
        %682 = vmatpush.msra.mxu0 0.0
        %683 = vmatpush.msra.mxu0 0.0
        %684 = vmatpush.msra.mxu0 0.0
        %685 = vmatpush.msra.mxu0 0.0
        %686 = vmatpush.msra.mxu0 0.0
        %687 = vmatpush.msra.mxu0 0.0
        %688 = vmatpush.msra.mxu0 0.0
        %689 = vmatpush.msra.mxu0 0.0
        %690 = vmatpush.msra.mxu0 0.0
        %691 = vmatpush.msra.mxu0 0.0
        %692 = vmatpush.msra.mxu0 0.0
        %693 = vmatpush.msra.mxu0 %v594
        %694 = vmatpush.msra.mxu0 %v590
        %695 = vmatpush.msra.mxu0 %v586
        %696 = vmatpush.msra.mxu0 %v582
        %697 = vmatmul.f32.gmra.mxu0 %v607
        %v698 = vpop.f32.mrf.mxu0
        %v699 = vadd.f32 %v600, %v698
        %700 = vmatmul.f32.gmra.mxu0 %v610
        %v701 = vpop.f32.mrf.mxu0
        %v702 = vadd.f32 %v600, %v701
        %703 = vdwg.mxu0
        %v704 = vld [vmem:[%s487] sm:$0xff]
        %v705 = vld [vmem:[#allocation11] sm:$0xff]
        %v706 = vld [vmem:[#allocation11 + $0x8] sm:$0xff]
        %v707 = vld [vmem:[#allocation11 + $0x10] sm:$0xff]
        %v708 = vld [vmem:[#allocation11 + $0x18] sm:$0xff]
        %v709 = vld [vmem:[#allocation11 + $0x20] sm:$0xff]
        %v710 = vld [vmem:[#allocation11 + $0x28] sm:$0xff]
        %v711 = vld [vmem:[#allocation11 + $0x30] sm:$0xff]
        %v712 = vld [vmem:[#allocation11 + $0x38] sm:$0xff]
        %v713 = vld [vmem:[#allocation11 + $0x40] sm:$0xff]
        %v714 = vld [vmem:[#allocation11 + $0x48] sm:$0xff]
        %v715 = vld [vmem:[#allocation11 + $0x50] sm:$0xff]
        %v716 = vld [vmem:[#allocation11 + $0x58] sm:$0xff]
        %v717 = vld [vmem:[#allocation11 + $0x60] sm:$0xff]
        %v718 = vld [vmem:[#allocation11 + $0x68] sm:$0xff]
        %v719 = vld [vmem:[#allocation11 + $0x70] sm:$0xff]
        %v720 = vld [vmem:[#allocation11 + $0x78] sm:$0xff]
        %v721 = vld [vmem:[%s6] sm:$0xf]
        %v723 = vperm.slane %v721, 0
        %v724 = vperm.slane %v721, 1
        %v725 = vperm.slane %v721, 2
        %v726 = vperm.slane %v721, 3
        %v732 = vsel %vm605, %v704, 0
        %734 = vmatpush.msra.mxu0 0.0
        %735 = vmatpush.msra.mxu0 0.0
        %736 = vmatpush.msra.mxu0 0.0
        %737 = vmatpush.msra.mxu0 0.0
        %738 = vmatpush.msra.mxu0 0.0
        %739 = vmatpush.msra.mxu0 0.0
        %740 = vmatpush.msra.mxu0 0.0
        %741 = vmatpush.msra.mxu0 0.0
        %742 = vmatpush.msra.mxu0 0.0
        %743 = vmatpush.msra.mxu0 0.0
        %744 = vmatpush.msra.mxu0 0.0
        %745 = vmatpush.msra.mxu0 0.0
        %746 = vmatpush.msra.mxu0 %v717
        %747 = vmatpush.msra.mxu0 %v713
        %748 = vmatpush.msra.mxu0 %v709
        %749 = vmatpush.msra.mxu0 %v705
        %750 = vmatmul.f32.gmra.mxu0 %v732
        %v751 = vpop.f32.mrf.mxu0
        %v752 = vadd.f32 %v723, %v751
        %753 = vdwg.mxu0
        %754 = vmatpush.msra.mxu0 0.0
        %755 = vmatpush.msra.mxu0 0.0
        %756 = vmatpush.msra.mxu0 0.0
        %757 = vmatpush.msra.mxu0 0.0
        %758 = vmatpush.msra.mxu0 0.0
        %759 = vmatpush.msra.mxu0 0.0
        %760 = vmatpush.msra.mxu0 0.0
        %761 = vmatpush.msra.mxu0 0.0
        %762 = vmatpush.msra.mxu0 0.0
        %763 = vmatpush.msra.mxu0 0.0
        %764 = vmatpush.msra.mxu0 0.0
        %765 = vmatpush.msra.mxu0 0.0
        %766 = vmatpush.msra.mxu0 %v718
        %767 = vmatpush.msra.mxu0 %v714
        %768 = vmatpush.msra.mxu0 %v710
        %769 = vmatpush.msra.mxu0 %v706
        %770 = vmatmul.f32.gmra.mxu0 %v732
        %v771 = vpop.f32.mrf.mxu0
        %v772 = vadd.f32 %v724, %v771
        %773 = vdwg.mxu0
        %774 = vmatpush.msra.mxu0 0.0
        %775 = vmatpush.msra.mxu0 0.0
        %776 = vmatpush.msra.mxu0 0.0
        %777 = vmatpush.msra.mxu0 0.0
        %778 = vmatpush.msra.mxu0 0.0
        %779 = vmatpush.msra.mxu0 0.0
        %780 = vmatpush.msra.mxu0 0.0
        %781 = vmatpush.msra.mxu0 0.0
        %782 = vmatpush.msra.mxu0 0.0
        %783 = vmatpush.msra.mxu0 0.0
        %784 = vmatpush.msra.mxu0 0.0
        %785 = vmatpush.msra.mxu0 0.0
        %786 = vmatpush.msra.mxu0 %v719
        %787 = vmatpush.msra.mxu0 %v715
        %788 = vmatpush.msra.mxu0 %v711
        %789 = vmatpush.msra.mxu0 %v707
        %790 = vmatmul.f32.gmra.mxu0 %v732
        %v791 = vpop.f32.mrf.mxu0
        %v792 = vadd.f32 %v725, %v791
        %793 = vdwg.mxu0
        %794 = vmatpush.msra.mxu0 0.0
        %795 = vmatpush.msra.mxu0 0.0
        %796 = vmatpush.msra.mxu0 0.0
        %797 = vmatpush.msra.mxu0 0.0
        %798 = vmatpush.msra.mxu0 0.0
        %799 = vmatpush.msra.mxu0 0.0
        %800 = vmatpush.msra.mxu0 0.0
        %801 = vmatpush.msra.mxu0 0.0
        %802 = vmatpush.msra.mxu0 0.0
        %803 = vmatpush.msra.mxu0 0.0
        %804 = vmatpush.msra.mxu0 0.0
        %805 = vmatpush.msra.mxu0 0.0
        %806 = vmatpush.msra.mxu0 %v720
        %807 = vmatpush.msra.mxu0 %v716
        %808 = vmatpush.msra.mxu0 %v712
        %809 = vmatpush.msra.mxu0 %v708
        %810 = vmatmul.f32.gmra.mxu0 %v732
        %v811 = vpop.f32.mrf.mxu0
        %v812 = vadd.f32 %v726, %v811
        %813 = vdwg.mxu0
        %v814 = vld [vmem:[%s497] sm:$0xff]
        %v815 = vld [vmem:[#allocation13] sm:$0xff]
        %v816 = vld [vmem:[#allocation13 + $0x8] sm:$0xff]
        %v817 = vld [vmem:[#allocation13 + $0x10] sm:$0xff]
        %v818 = vld [vmem:[#allocation13 + $0x18] sm:$0xff]
        %v819 = vld [vmem:[#allocation13 + $0x20] sm:$0xff]
        %v820 = vld [vmem:[#allocation13 + $0x28] sm:$0xff]
        %v821 = vld [vmem:[#allocation13 + $0x30] sm:$0xff]
        %v822 = vld [vmem:[#allocation13 + $0x38] sm:$0xff]
        %v823 = vld [vmem:[#allocation13 + $0x40] sm:$0xff]
        %v824 = vld [vmem:[#allocation13 + $0x48] sm:$0xff]
        %v825 = vld [vmem:[#allocation13 + $0x50] sm:$0xff]
        %v826 = vld [vmem:[#allocation13 + $0x58] sm:$0xff]
        %v827 = vld [vmem:[#allocation13 + $0x60] sm:$0xff]
        %v828 = vld [vmem:[#allocation13 + $0x68] sm:$0xff]
        %v829 = vld [vmem:[#allocation13 + $0x70] sm:$0xff]
        %v830 = vld [vmem:[#allocation13 + $0x78] sm:$0xff]
        %v831 = vld [vmem:[#allocation14] sm:$0xf]
        %v833 = vperm.slane %v831, 0
        %v834 = vperm.slane %v831, 1
        %v835 = vperm.slane %v831, 2
        %v836 = vperm.slane %v831, 3
        %v842 = vsel %vm605, %v814, 0
        %844 = vmatpush.msra.mxu0 0.0
        %845 = vmatpush.msra.mxu0 0.0
        %846 = vmatpush.msra.mxu0 0.0
        %847 = vmatpush.msra.mxu0 0.0
        %848 = vmatpush.msra.mxu0 0.0
        %849 = vmatpush.msra.mxu0 0.0
        %850 = vmatpush.msra.mxu0 0.0
        %851 = vmatpush.msra.mxu0 0.0
        %852 = vmatpush.msra.mxu0 0.0
        %853 = vmatpush.msra.mxu0 0.0
        %854 = vmatpush.msra.mxu0 0.0
        %855 = vmatpush.msra.mxu0 0.0
        %856 = vmatpush.msra.mxu0 %v827
        %857 = vmatpush.msra.mxu0 %v823
        %858 = vmatpush.msra.mxu0 %v819
        %859 = vmatpush.msra.mxu0 %v815
        %860 = vmatmul.f32.gmra.mxu0 %v842
        %v861 = vpop.f32.mrf.mxu0
        %v862 = vadd.f32 %v833, %v861
        %863 = vdwg.mxu0
        %864 = vmatpush.msra.mxu0 0.0
        %865 = vmatpush.msra.mxu0 0.0
        %866 = vmatpush.msra.mxu0 0.0
        %867 = vmatpush.msra.mxu0 0.0
        %868 = vmatpush.msra.mxu0 0.0
        %869 = vmatpush.msra.mxu0 0.0
        %870 = vmatpush.msra.mxu0 0.0
        %871 = vmatpush.msra.mxu0 0.0
        %872 = vmatpush.msra.mxu0 0.0
        %873 = vmatpush.msra.mxu0 0.0
        %874 = vmatpush.msra.mxu0 0.0
        %875 = vmatpush.msra.mxu0 0.0
        %876 = vmatpush.msra.mxu0 %v828
        %877 = vmatpush.msra.mxu0 %v824
        %878 = vmatpush.msra.mxu0 %v820
        %879 = vmatpush.msra.mxu0 %v816
        %880 = vmatmul.f32.gmra.mxu0 %v842
        %v881 = vpop.f32.mrf.mxu0
        %v882 = vadd.f32 %v834, %v881
        %883 = vdwg.mxu0
        %884 = vmatpush.msra.mxu0 0.0
        %885 = vmatpush.msra.mxu0 0.0
        %886 = vmatpush.msra.mxu0 0.0
        %887 = vmatpush.msra.mxu0 0.0
        %888 = vmatpush.msra.mxu0 0.0
        %889 = vmatpush.msra.mxu0 0.0
        %890 = vmatpush.msra.mxu0 0.0
        %891 = vmatpush.msra.mxu0 0.0
        %892 = vmatpush.msra.mxu0 0.0
        %893 = vmatpush.msra.mxu0 0.0
        %894 = vmatpush.msra.mxu0 0.0
        %895 = vmatpush.msra.mxu0 0.0
        %896 = vmatpush.msra.mxu0 %v829
        %897 = vmatpush.msra.mxu0 %v825
        %898 = vmatpush.msra.mxu0 %v821
        %899 = vmatpush.msra.mxu0 %v817
        %900 = vmatmul.f32.gmra.mxu0 %v842
        %v901 = vpop.f32.mrf.mxu0
        %v902 = vadd.f32 %v835, %v901
        %903 = vdwg.mxu0
        %904 = vmatpush.msra.mxu0 0.0
        %905 = vmatpush.msra.mxu0 0.0
        %906 = vmatpush.msra.mxu0 0.0
        %907 = vmatpush.msra.mxu0 0.0
        %908 = vmatpush.msra.mxu0 0.0
        %909 = vmatpush.msra.mxu0 0.0
        %910 = vmatpush.msra.mxu0 0.0
        %911 = vmatpush.msra.mxu0 0.0
        %912 = vmatpush.msra.mxu0 0.0
        %913 = vmatpush.msra.mxu0 0.0
        %914 = vmatpush.msra.mxu0 0.0
        %915 = vmatpush.msra.mxu0 0.0
        %916 = vmatpush.msra.mxu0 %v830
        %917 = vmatpush.msra.mxu0 %v826
        %918 = vmatpush.msra.mxu0 %v822
        %919 = vmatpush.msra.mxu0 %v818
        %920 = vmatmul.f32.gmra.mxu0 %v842
        %v921 = vpop.f32.mrf.mxu0
        %v922 = vadd.f32 %v836, %v921
        %923 = vdwg.mxu0
        %924 = vmatpush.xpose.msra.mxu0 0.0
        %925 = vmatpush.xpose.msra.mxu0 0.0
        %926 = vmatpush.xpose.msra.mxu0 0.0
        %927 = vmatpush.xpose.msra.mxu0 0.0
        %928 = vmatpush.xpose.msra.mxu0 0.0
        %929 = vmatpush.xpose.msra.mxu0 0.0
        %930 = vmatpush.xpose.msra.mxu0 0.0
        %931 = vmatpush.xpose.msra.mxu0 0.0
        %932 = vmatpush.xpose.msra.mxu0 0.0
        %933 = vmatpush.xpose.msra.mxu0 0.0
        %934 = vmatpush.xpose.msra.mxu0 0.0
        %935 = vmatpush.xpose.msra.mxu0 0.0
        %936 = vmatpush.xpose.msra.mxu0 0.0
        %937 = vmatpush.xpose.msra.mxu0 0.0
        %938 = vmatpush.xpose.msra.mxu0 0.0
        %939 = vmatpush.xpose.msra.mxu0 %v752
        %940 = vmatmul.f32.gmra.mxu0 %v630
        %v941 = vpop.f32.mrf.mxu0
        %v942 = vadd.f32 0.0, %v941
        %943 = vmatmul.f32.gmra.mxu0 %v633
        %v944 = vpop.f32.mrf.mxu0
        %v945 = vadd.f32 0.0, %v944
        %946 = vdwg.mxu0
        %947 = vmatpush.xpose.msra.mxu0 0.0
        %948 = vmatpush.xpose.msra.mxu0 0.0
        %949 = vmatpush.xpose.msra.mxu0 0.0
        %950 = vmatpush.xpose.msra.mxu0 0.0
        %951 = vmatpush.xpose.msra.mxu0 0.0
        %952 = vmatpush.xpose.msra.mxu0 0.0
        %953 = vmatpush.xpose.msra.mxu0 0.0
        %954 = vmatpush.xpose.msra.mxu0 0.0
        %955 = vmatpush.xpose.msra.mxu0 0.0
        %956 = vmatpush.xpose.msra.mxu0 0.0
        %957 = vmatpush.xpose.msra.mxu0 0.0
        %958 = vmatpush.xpose.msra.mxu0 0.0
        %959 = vmatpush.xpose.msra.mxu0 0.0
        %960 = vmatpush.xpose.msra.mxu0 0.0
        %961 = vmatpush.xpose.msra.mxu0 0.0
        %962 = vmatpush.xpose.msra.mxu0 %v772
        %963 = vmatmul.f32.gmra.mxu0 %v653
        %v964 = vpop.f32.mrf.mxu0
        %v965 = vadd.f32 0.0, %v964
        %966 = vmatmul.f32.gmra.mxu0 %v656
        %v967 = vpop.f32.mrf.mxu0
        %v968 = vadd.f32 0.0, %v967
        %969 = vdwg.mxu0
        %970 = vmatpush.xpose.msra.mxu0 0.0
        %971 = vmatpush.xpose.msra.mxu0 0.0
        %972 = vmatpush.xpose.msra.mxu0 0.0
        %973 = vmatpush.xpose.msra.mxu0 0.0
        %974 = vmatpush.xpose.msra.mxu0 0.0
        %975 = vmatpush.xpose.msra.mxu0 0.0
        %976 = vmatpush.xpose.msra.mxu0 0.0
        %977 = vmatpush.xpose.msra.mxu0 0.0
        %978 = vmatpush.xpose.msra.mxu0 0.0
        %979 = vmatpush.xpose.msra.mxu0 0.0
        %980 = vmatpush.xpose.msra.mxu0 0.0
        %981 = vmatpush.xpose.msra.mxu0 0.0
        %982 = vmatpush.xpose.msra.mxu0 0.0
        %983 = vmatpush.xpose.msra.mxu0 0.0
        %984 = vmatpush.xpose.msra.mxu0 0.0
        %985 = vmatpush.xpose.msra.mxu0 %v792
        %986 = vmatmul.f32.gmra.mxu0 %v676
        %v987 = vpop.f32.mrf.mxu0
        %v988 = vadd.f32 0.0, %v987
        %989 = vmatmul.f32.gmra.mxu0 %v679
        %v990 = vpop.f32.mrf.mxu0
        %v991 = vadd.f32 0.0, %v990
        %992 = vdwg.mxu0
        %993 = vmatpush.xpose.msra.mxu0 0.0
        %994 = vmatpush.xpose.msra.mxu0 0.0
        %995 = vmatpush.xpose.msra.mxu0 0.0
        %996 = vmatpush.xpose.msra.mxu0 0.0
        %997 = vmatpush.xpose.msra.mxu0 0.0
        %998 = vmatpush.xpose.msra.mxu0 0.0
        %999 = vmatpush.xpose.msra.mxu0 0.0
        %1000 = vmatpush.xpose.msra.mxu0 0.0
        %1001 = vmatpush.xpose.msra.mxu0 0.0
        %1002 = vmatpush.xpose.msra.mxu0 0.0
        %1003 = vmatpush.xpose.msra.mxu0 0.0
        %1004 = vmatpush.xpose.msra.mxu0 0.0
        %1005 = vmatpush.xpose.msra.mxu0 0.0
        %1006 = vmatpush.xpose.msra.mxu0 0.0
        %1007 = vmatpush.xpose.msra.mxu0 0.0
        %1008 = vmatpush.xpose.msra.mxu0 %v812
        %1009 = vmatmul.f32.gmra.mxu0 %v699
        %v1010 = vpop.f32.mrf.mxu0
        %v1011 = vadd.f32 0.0, %v1010
        %1012 = vmatmul.f32.gmra.mxu0 %v702
        %v1013 = vpop.f32.mrf.mxu0
        %v1014 = vadd.f32 0.0, %v1013
        %1015 = vdwg.mxu0
        %vm1016 = vcmask 64512
        %v1017 = vsel %vm1016, %v942, -inf
        %1018 = vmax.xlane.f32.xlu0 %v1017
        %v1019 = vpop.xlane.xlu0 %1018
        %v1020 = vsel %vm1016, %v945, -inf
        %1021 = vmax.xlane.f32.xlu0 %v1020
        %v1022 = vpop.xlane.xlu0 %1021
        %v1023 = vsel %vm1016, %v965, -inf
        %1024 = vmax.xlane.f32.xlu0 %v1023
        %v1025 = vpop.xlane.xlu0 %1024
        %v1026 = vsel %vm1016, %v968, -inf
        %1027 = vmax.xlane.f32.xlu0 %v1026
        %v1028 = vpop.xlane.xlu0 %1027
        %v1029 = vsel %vm1016, %v988, -inf
        %1030 = vmax.xlane.f32.xlu0 %v1029
        %v1031 = vpop.xlane.xlu0 %1030
        %v1032 = vsel %vm1016, %v991, -inf
        %1033 = vmax.xlane.f32.xlu0 %v1032
        %v1034 = vpop.xlane.xlu0 %1033
        %v1035 = vsel %vm1016, %v1011, -inf
        %1036 = vmax.xlane.f32.xlu0 %v1035
        %v1037 = vpop.xlane.xlu0 %1036
        %v1038 = vsel %vm1016, %v1014, -inf
        %1039 = vmax.xlane.f32.xlu0 %v1038
        %v1040 = vpop.xlane.xlu0 %1039
        %v1041 = vsub.f32 %v942, %v1019
        %v1042 = vsub.f32 %v945, %v1022
        %v1043 = vsub.f32 %v965, %v1025
        %v1044 = vsub.f32 %v968, %v1028
        %v1045 = vsub.f32 %v988, %v1031
        %v1046 = vsub.f32 %v991, %v1034
        %v1047 = vsub.f32 %v1011, %v1037
        %v1048 = vsub.f32 %v1014, %v1040
        %v1049 = vmul.f32 %v1041, 1.442695
        %v1050 = vpow.pop %v1049
        %v1051 = vmul.f32 %v1042, 1.442695
        %v1052 = vpow.pop %v1051
        %v1053 = vmul.f32 %v1043, 1.442695
        %v1054 = vpow.pop %v1053
        %v1055 = vmul.f32 %v1044, 1.442695
        %v1056 = vpow.pop %v1055
        %v1057 = vmul.f32 %v1045, 1.442695
        %v1058 = vpow.pop %v1057
        %v1059 = vmul.f32 %v1046, 1.442695
        %v1060 = vpow.pop %v1059
        %v1061 = vmul.f32 %v1047, 1.442695
        %v1062 = vpow.pop %v1061
        %v1063 = vmul.f32 %v1048, 1.442695
        %v1064 = vpow.pop %v1063
        %v1065 = vsel %vm1016, %v1050, 0.0
        %1066 = vadd.xlane.f32.xlu0 %v1065
        %v1067 = vpop.xlane.xlu0 %1066
        %v1068 = vsel %vm1016, %v1052, 0.0
        %1069 = vadd.xlane.f32.xlu0 %v1068
        %v1070 = vpop.xlane.xlu0 %1069
        %v1071 = vsel %vm1016, %v1054, 0.0
        %1072 = vadd.xlane.f32.xlu0 %v1071
        %v1073 = vpop.xlane.xlu0 %1072
        %v1074 = vsel %vm1016, %v1056, 0.0
        %1075 = vadd.xlane.f32.xlu0 %v1074
        %v1076 = vpop.xlane.xlu0 %1075
        %v1077 = vsel %vm1016, %v1058, 0.0
        %1078 = vadd.xlane.f32.xlu0 %v1077
        %v1079 = vpop.xlane.xlu0 %1078
        %v1080 = vsel %vm1016, %v1060, 0.0
        %1081 = vadd.xlane.f32.xlu0 %v1080
        %v1082 = vpop.xlane.xlu0 %1081
        %v1083 = vsel %vm1016, %v1062, 0.0
        %1084 = vadd.xlane.f32.xlu0 %v1083
        %v1085 = vpop.xlane.xlu0 %1084
        %v1086 = vsel %vm1016, %v1064, 0.0
        %1087 = vadd.xlane.f32.xlu0 %v1086
        %v1088 = vpop.xlane.xlu0 %1087
        %v1090 = vsel %vm1016, %v1050, 0
        %v1093 = vsel %vm1016, %v1052, 0
        %1095 = vmatpush.msra.mxu0 0.0
        %1096 = vmatpush.msra.mxu0 0.0
        %1097 = vmatpush.msra.mxu0 0.0
        %1098 = vmatpush.msra.mxu0 0.0
        %1099 = vmatpush.msra.mxu0 0.0
        %1100 = vmatpush.msra.mxu0 0.0
        %1101 = vmatpush.msra.mxu0 0.0
        %1102 = vmatpush.msra.mxu0 0.0
        %1103 = vmatpush.msra.mxu0 0.0
        %1104 = vmatpush.msra.mxu0 0.0
        %1105 = vmatpush.msra.mxu0 0.0
        %1106 = vmatpush.msra.mxu0 0.0
        %1107 = vmatpush.msra.mxu0 0.0
        %1108 = vmatpush.msra.mxu0 0.0
        %1109 = vmatpush.msra.mxu0 0.0
        %1110 = vmatpush.msra.mxu0 %v862
        %1111 = vmatmul.f32.gmra.mxu0 %v1090
        %v1112 = vpop.f32.mrf.mxu0
        %v1113 = vadd.f32 0.0, %v1112
        %1114 = vmatmul.f32.gmra.mxu0 %v1093
        %v1115 = vpop.f32.mrf.mxu0
        %v1116 = vadd.f32 0.0, %v1115
        %1117 = vdwg.mxu0
        %v1119 = vsel %vm1016, %v1054, 0
        %v1122 = vsel %vm1016, %v1056, 0
        %1124 = vmatpush.msra.mxu0 0.0
        %1125 = vmatpush.msra.mxu0 0.0
        %1126 = vmatpush.msra.mxu0 0.0
        %1127 = vmatpush.msra.mxu0 0.0
        %1128 = vmatpush.msra.mxu0 0.0
        %1129 = vmatpush.msra.mxu0 0.0
        %1130 = vmatpush.msra.mxu0 0.0
        %1131 = vmatpush.msra.mxu0 0.0
        %1132 = vmatpush.msra.mxu0 0.0
        %1133 = vmatpush.msra.mxu0 0.0
        %1134 = vmatpush.msra.mxu0 0.0
        %1135 = vmatpush.msra.mxu0 0.0
        %1136 = vmatpush.msra.mxu0 0.0
        %1137 = vmatpush.msra.mxu0 0.0
        %1138 = vmatpush.msra.mxu0 0.0
        %1139 = vmatpush.msra.mxu0 %v882
        %1140 = vmatmul.f32.gmra.mxu0 %v1119
        %v1141 = vpop.f32.mrf.mxu0
        %v1142 = vadd.f32 0.0, %v1141
        %1143 = vmatmul.f32.gmra.mxu0 %v1122
        %v1144 = vpop.f32.mrf.mxu0
        %v1145 = vadd.f32 0.0, %v1144
        %1146 = vdwg.mxu0
        %v1148 = vsel %vm1016, %v1058, 0
        %v1151 = vsel %vm1016, %v1060, 0
        %1153 = vmatpush.msra.mxu0 0.0
        %1154 = vmatpush.msra.mxu0 0.0
        %1155 = vmatpush.msra.mxu0 0.0
        %1156 = vmatpush.msra.mxu0 0.0
        %1157 = vmatpush.msra.mxu0 0.0
        %1158 = vmatpush.msra.mxu0 0.0
        %1159 = vmatpush.msra.mxu0 0.0
        %1160 = vmatpush.msra.mxu0 0.0
        %1161 = vmatpush.msra.mxu0 0.0
        %1162 = vmatpush.msra.mxu0 0.0
        %1163 = vmatpush.msra.mxu0 0.0
        %1164 = vmatpush.msra.mxu0 0.0
        %1165 = vmatpush.msra.mxu0 0.0
        %1166 = vmatpush.msra.mxu0 0.0
        %1167 = vmatpush.msra.mxu0 0.0
        %1168 = vmatpush.msra.mxu0 %v902
        %1169 = vmatmul.f32.gmra.mxu0 %v1148
        %v1170 = vpop.f32.mrf.mxu0
        %v1171 = vadd.f32 0.0, %v1170
        %1172 = vmatmul.f32.gmra.mxu0 %v1151
        %v1173 = vpop.f32.mrf.mxu0
        %v1174 = vadd.f32 0.0, %v1173
        %1175 = vdwg.mxu0
        %v1177 = vsel %vm1016, %v1062, 0
        %v1180 = vsel %vm1016, %v1064, 0
        %1182 = vmatpush.msra.mxu0 0.0
        %1183 = vmatpush.msra.mxu0 0.0
        %1184 = vmatpush.msra.mxu0 0.0
        %1185 = vmatpush.msra.mxu0 0.0
        %1186 = vmatpush.msra.mxu0 0.0
        %1187 = vmatpush.msra.mxu0 0.0
        %1188 = vmatpush.msra.mxu0 0.0
        %1189 = vmatpush.msra.mxu0 0.0
        %1190 = vmatpush.msra.mxu0 0.0
        %1191 = vmatpush.msra.mxu0 0.0
        %1192 = vmatpush.msra.mxu0 0.0
        %1193 = vmatpush.msra.mxu0 0.0
        %1194 = vmatpush.msra.mxu0 0.0
        %1195 = vmatpush.msra.mxu0 0.0
        %1196 = vmatpush.msra.mxu0 0.0
        %1197 = vmatpush.msra.mxu0 %v922
        %1198 = vmatmul.f32.gmra.mxu0 %v1177
        %v1199 = vpop.f32.mrf.mxu0
        %v1200 = vadd.f32 0.0, %v1199
        %1201 = vmatmul.f32.gmra.mxu0 %v1180
        %v1202 = vpop.f32.mrf.mxu0
        %v1203 = vadd.f32 0.0, %v1202
        %1204 = vdwg.mxu0
        %v1205 = vrcp.pop %v1067
        %v1206 = vrcp.pop %v1070
        %v1207 = vrcp.pop %v1073
        %v1208 = vrcp.pop %v1076
        %v1209 = vrcp.pop %v1079
        %v1210 = vrcp.pop %v1082
        %v1211 = vrcp.pop %v1085
        %v1212 = vrcp.pop %v1088
        %v1213 = vmul.f32 %v1113, %v1205
        %v1214 = vmul.f32 %v1116, %v1206
        %v1215 = vmul.f32 %v1142, %v1207
        %v1216 = vmul.f32 %v1145, %v1208
        %v1217 = vmul.f32 %v1171, %v1209
        %v1218 = vmul.f32 %v1174, %v1210
        %v1219 = vmul.f32 %v1200, %v1211
        %v1220 = vmul.f32 %v1203, %v1212
        %v1221 = vld [vmem:[#allocation16] sm:$0xff]
        %v1222 = vld [vmem:[#allocation16 + $0x8] sm:$0xff]
        %v1223 = vld [vmem:[#allocation16 + $0x10] sm:$0xff]
        %v1224 = vld [vmem:[#allocation16 + $0x18] sm:$0xff]
        %v1225 = vld [vmem:[#allocation16 + $0x20] sm:$0xff]
        %v1226 = vld [vmem:[#allocation16 + $0x28] sm:$0xff]
        %v1227 = vld [vmem:[#allocation16 + $0x30] sm:$0xff]
        %v1228 = vld [vmem:[#allocation16 + $0x38] sm:$0xff]
        %v1229 = vld [vmem:[#allocation16 + $0x40] sm:$0xff]
        %v1230 = vld [vmem:[#allocation16 + $0x48] sm:$0xff]
        %v1231 = vld [vmem:[#allocation16 + $0x50] sm:$0xff]
        %v1232 = vld [vmem:[#allocation16 + $0x58] sm:$0xff]
        %v1233 = vld [vmem:[#allocation16 + $0x60] sm:$0xff]
        %v1234 = vld [vmem:[#allocation16 + $0x68] sm:$0xff]
        %v1235 = vld [vmem:[#allocation16 + $0x70] sm:$0xff]
        %v1236 = vld [vmem:[#allocation16 + $0x78] sm:$0xff]
        %v1237 = vld [vmem:[#allocation16 + $0x80] sm:$0xff]
        %v1238 = vld [vmem:[#allocation16 + $0x88] sm:$0xff]
        %v1239 = vld [vmem:[#allocation16 + $0x90] sm:$0xff]
        %v1240 = vld [vmem:[#allocation16 + $0x98] sm:$0xff]
        %v1241 = vld [vmem:[#allocation16 + $0xa0] sm:$0xff]
        %v1242 = vld [vmem:[#allocation16 + $0xa8] sm:$0xff]
        %v1243 = vld [vmem:[#allocation16 + $0xb0] sm:$0xff]
        %v1244 = vld [vmem:[#allocation16 + $0xb8] sm:$0xff]
        %v1245 = vld [vmem:[#allocation16 + $0xc0] sm:$0xff]
        %v1246 = vld [vmem:[#allocation16 + $0xc8] sm:$0xff]
        %v1247 = vld [vmem:[#allocation16 + $0xd0] sm:$0xff]
        %v1248 = vld [vmem:[#allocation16 + $0xd8] sm:$0xff]
        %v1249 = vld [vmem:[#allocation16 + $0xe0] sm:$0xff]
        %v1250 = vld [vmem:[#allocation16 + $0xe8] sm:$0xff]
        %v1251 = vld [vmem:[#allocation16 + $0xf0] sm:$0xff]
        %v1252 = vld [vmem:[#allocation16 + $0xf8] sm:$0xff]
        %v1253 = vld [vmem:[#allocation16 + $0x100] sm:$0xff]
        %v1254 = vld [vmem:[#allocation16 + $0x108] sm:$0xff]
        %v1255 = vld [vmem:[#allocation16 + $0x110] sm:$0xff]
        %v1256 = vld [vmem:[#allocation16 + $0x118] sm:$0xff]
        %v1257 = vld [vmem:[#allocation16 + $0x120] sm:$0xff]
        %v1258 = vld [vmem:[#allocation16 + $0x128] sm:$0xff]
        %v1259 = vld [vmem:[#allocation16 + $0x130] sm:$0xff]
        %v1260 = vld [vmem:[#allocation16 + $0x138] sm:$0xff]
        %v1261 = vld [vmem:[#allocation16 + $0x140] sm:$0xff]
        %v1262 = vld [vmem:[#allocation16 + $0x148] sm:$0xff]
        %v1263 = vld [vmem:[#allocation16 + $0x150] sm:$0xff]
        %v1264 = vld [vmem:[#allocation16 + $0x158] sm:$0xff]
        %v1265 = vld [vmem:[#allocation16 + $0x160] sm:$0xff]
        %v1266 = vld [vmem:[#allocation16 + $0x168] sm:$0xff]
        %v1267 = vld [vmem:[#allocation16 + $0x170] sm:$0xff]
        %v1268 = vld [vmem:[#allocation16 + $0x178] sm:$0xff]
        %v1269 = vld [vmem:[#allocation16 + $0x180] sm:$0xff]
        %v1270 = vld [vmem:[#allocation16 + $0x188] sm:$0xff]
        %v1271 = vld [vmem:[#allocation16 + $0x190] sm:$0xff]
        %v1272 = vld [vmem:[#allocation16 + $0x198] sm:$0xff]
        %v1273 = vld [vmem:[#allocation16 + $0x1a0] sm:$0xff]
        %v1274 = vld [vmem:[#allocation16 + $0x1a8] sm:$0xff]
        %v1275 = vld [vmem:[#allocation16 + $0x1b0] sm:$0xff]
        %v1276 = vld [vmem:[#allocation16 + $0x1b8] sm:$0xff]
        %v1277 = vld [vmem:[#allocation16 + $0x1c0] sm:$0xff]
        %v1278 = vld [vmem:[#allocation16 + $0x1c8] sm:$0xff]
        %v1279 = vld [vmem:[#allocation16 + $0x1d0] sm:$0xff]
        %v1280 = vld [vmem:[#allocation16 + $0x1d8] sm:$0xff]
        %v1281 = vld [vmem:[#allocation16 + $0x1e0] sm:$0xff]
        %v1282 = vld [vmem:[#allocation16 + $0x1e8] sm:$0xff]
        %v1283 = vld [vmem:[#allocation16 + $0x1f0] sm:$0xff]
        %v1284 = vld [vmem:[#allocation16 + $0x1f8] sm:$0xff]
        %v1285 = vld [vmem:[%s10] sm:$0x1]
        %v1287 = vperm.slane %v1285, 0
        %1289 = vmatpush.msra.mxu0 %v1236
        %1290 = vmatpush.msra.mxu0 %v1235
        %1291 = vmatpush.msra.mxu0 %v1234
        %1292 = vmatpush.msra.mxu0 %v1233
        %1293 = vmatpush.msra.mxu0 %v1232
        %1294 = vmatpush.msra.mxu0 %v1231
        %1295 = vmatpush.msra.mxu0 %v1230
        %1296 = vmatpush.msra.mxu0 %v1229
        %1297 = vmatpush.msra.mxu0 %v1228
        %1298 = vmatpush.msra.mxu0 %v1227
        %1299 = vmatpush.msra.mxu0 %v1226
        %1300 = vmatpush.msra.mxu0 %v1225
        %1301 = vmatpush.msra.mxu0 %v1224
        %1302 = vmatpush.msra.mxu0 %v1223
        %1303 = vmatpush.msra.mxu0 %v1222
        %1304 = vmatpush.msra.mxu0 %v1221
        %1305 = vmatmul.f32.gmra.mxu0 %v1213
        %v1306 = vpop.f32.mrf.mxu0
        %v1307 = vadd.f32 %v1287, %v1306
        %1308 = vmatmul.f32.gmra.mxu0 %v1214
        %v1309 = vpop.f32.mrf.mxu0
        %v1310 = vadd.f32 %v1287, %v1309
        %1311 = vdwg.mxu0
        %1312 = vmatpush.msra.mxu0 %v1252
        %1313 = vmatpush.msra.mxu0 %v1251
        %1314 = vmatpush.msra.mxu0 %v1250
        %1315 = vmatpush.msra.mxu0 %v1249
        %1316 = vmatpush.msra.mxu0 %v1248
        %1317 = vmatpush.msra.mxu0 %v1247
        %1318 = vmatpush.msra.mxu0 %v1246
        %1319 = vmatpush.msra.mxu0 %v1245
        %1320 = vmatpush.msra.mxu0 %v1244
        %1321 = vmatpush.msra.mxu0 %v1243
        %1322 = vmatpush.msra.mxu0 %v1242
        %1323 = vmatpush.msra.mxu0 %v1241
        %1324 = vmatpush.msra.mxu0 %v1240
        %1325 = vmatpush.msra.mxu0 %v1239
        %1326 = vmatpush.msra.mxu0 %v1238
        %1327 = vmatpush.msra.mxu0 %v1237
        %1328 = vmatmul.f32.gmra.mxu0 %v1215
        %v1329 = vpop.f32.mrf.mxu0
        %v1330 = vadd.f32 %v1307, %v1329
        %1331 = vmatmul.f32.gmra.mxu0 %v1216
        %v1332 = vpop.f32.mrf.mxu0
        %v1333 = vadd.f32 %v1310, %v1332
        %1334 = vdwg.mxu0
        %1335 = vmatpush.msra.mxu0 %v1268
        %1336 = vmatpush.msra.mxu0 %v1267
        %1337 = vmatpush.msra.mxu0 %v1266
        %1338 = vmatpush.msra.mxu0 %v1265
        %1339 = vmatpush.msra.mxu0 %v1264
        %1340 = vmatpush.msra.mxu0 %v1263
        %1341 = vmatpush.msra.mxu0 %v1262
        %1342 = vmatpush.msra.mxu0 %v1261
        %1343 = vmatpush.msra.mxu0 %v1260
        %1344 = vmatpush.msra.mxu0 %v1259
        %1345 = vmatpush.msra.mxu0 %v1258
        %1346 = vmatpush.msra.mxu0 %v1257
        %1347 = vmatpush.msra.mxu0 %v1256
        %1348 = vmatpush.msra.mxu0 %v1255
        %1349 = vmatpush.msra.mxu0 %v1254
        %1350 = vmatpush.msra.mxu0 %v1253
        %1351 = vmatmul.f32.gmra.mxu0 %v1217
        %v1352 = vpop.f32.mrf.mxu0
        %v1353 = vadd.f32 %v1330, %v1352
        %1354 = vmatmul.f32.gmra.mxu0 %v1218
        %v1355 = vpop.f32.mrf.mxu0
        %v1356 = vadd.f32 %v1333, %v1355
        %1357 = vdwg.mxu0
        %1358 = vmatpush.msra.mxu0 %v1284
        %1359 = vmatpush.msra.mxu0 %v1283
        %1360 = vmatpush.msra.mxu0 %v1282
        %1361 = vmatpush.msra.mxu0 %v1281
        %1362 = vmatpush.msra.mxu0 %v1280
        %1363 = vmatpush.msra.mxu0 %v1279
        %1364 = vmatpush.msra.mxu0 %v1278
        %1365 = vmatpush.msra.mxu0 %v1277
        %1366 = vmatpush.msra.mxu0 %v1276
        %1367 = vmatpush.msra.mxu0 %v1275
        %1368 = vmatpush.msra.mxu0 %v1274
        %1369 = vmatpush.msra.mxu0 %v1273
        %1370 = vmatpush.msra.mxu0 %v1272
        %1371 = vmatpush.msra.mxu0 %v1271
        %1372 = vmatpush.msra.mxu0 %v1270
        %1373 = vmatpush.msra.mxu0 %v1269
        %1374 = vmatmul.f32.gmra.mxu0 %v1219
        %v1375 = vpop.f32.mrf.mxu0
        %v1376 = vadd.f32 %v1353, %v1375
        %1377 = vmatmul.f32.gmra.mxu0 %v1220
        %v1378 = vpop.f32.mrf.mxu0
        %v1379 = vadd.f32 %v1356, %v1378
        %1380 = vdwg.mxu0
        %1381 = vst [vmem:[%s576] sm:$0xff] %v1376
        %1382 = vst [vmem:[%s576 + $0x8] sm:$0xff] %v1379
        %s1383 = sand.u32 %s288, 1
        %s1384 = scalar_lea.sflag [#allocation4], %s1383
        %s1385 = sand.u32 %s288, 1
        %s1386 = smul.addr %s1385, 16
        %s1387 = scalar_lea.vmem [#allocation17], %s1386
        // Predicated region
        $region101: #{tpu_custom_call.1} parent=63 // pred_check
          %p1388 = pneg %p298
        $region102: #{tpu_custom_call.1} parent=63 // pred_check_branch
          %1390 = sbr.rel (%p1388) target = $region104
        $region103: #{tpu_custom_call.1} parent=63 // pred_region
          %1392 = vsyncadd %s1384, 0
          %s1393 = smul.addr %s34, 2
          %s1394 = smul.addr %s1393, 8
          %s1395 = scalar_lea.hbm %s11, %s1394
          %s1396 = sshll.u32 %s1387, 4
          %s1397 = int_to_ptr.vmem [resolvable:$true] %s1396
          %s1398 = sshll.u32 %s1395, 4
          %s1399 = int_to_ptr.hbm [resolvable:$true] %s1398
          %1404 = dma.vmem_to_hbm [thread:$0]  %s1397, 256, %s1399, %s1384, 128, 128, 8
        $region104: #{tpu_custom_call.1} parent=63 // pred_fallthru
          _
      $region64: #{tpu_custom_call.1} parent=5 // pred_fallthru
        _
      %p1405 = scmp.le.s32.totalorder 2, %s29
      // Predicated region
      $region105: #{tpu_custom_call.1} parent=5 // pred_check
        %p1406 = pneg %p1405
      $region106: #{tpu_custom_call.1} parent=5 // pred_check_branch
        %1408 = sbr.rel (%p1406) target = $region108
      $region107: #{tpu_custom_call.1} parent=5 // pred_region
        %s1409 = ssub.s32 %s29, 2
        // Predicated region
        $region109: #{tpu_custom_call.1} parent=107 // pred_check
          %p1410 = pneg %p304
        $region110: #{tpu_custom_call.1} parent=107 // pred_check_branch
          %1412 = sbr.rel (%p1410) target = $region112
        $region111: #{tpu_custom_call.1} parent=107 // pred_region
          %s1413 = sand.u32 %s289, 1
          %s1414 = scalar_lea.sflag [#allocation4], %s1413
          %s1415 = sand.u32 %s289, 1
          %s1416 = smul.addr %s1415, 16
          %s1417 = scalar_lea.vmem [#allocation17], %s1416
          %1419 = dma.done %s1414, 256
        $region112: #{tpu_custom_call.1} parent=107 // pred_fallthru
          _
      $region108: #{tpu_custom_call.1} parent=5 // pred_fallthru
        _
    $region6: #{tpu_custom_call.1} parent=1 // loop_footer
      %s33 = sadd.s32 1, %s29
    $region7: #{tpu_custom_call.1} parent=1 // loop_footer_branch
      %28 = sbr.rel target = $region3
    $region8: #{tpu_custom_call.1} parent=1 // loop_exit
      _
    %1420 = vsyncpa [#allocation3], 1
    %s1421 = scalar_lea.sflag [#allocation3], 1
    %1422 = vsyncpa %s1421, 1
    %1423 = vsyncpa [#allocation6], 1
    %s1424 = scalar_lea.sflag [#allocation6], 1
    %1425 = vsyncpa %s1424, 1
    %1426 = vsyncpa [#allocation9], 1
    %1427 = vsyncpa [#allocation12], 1
    %1428 = vsyncpa [#allocation15], 1
    %1429 = vsyncpa [#allocation4], 1
    %s1430 = scalar_lea.sflag [#allocation4], 1
    %1431 = vsyncpa %s1430, 1

</llo_original>
